<compile_context>
chip_gen: v5e
topology: v5e:2x2
jax: 0.10.0
libtpu: 0.0.40
codegen_flags: <defaults>
</compile_context>

<pallas_src>
import jax
import jax.numpy as jnp
from jax.experimental import pallas as pl
from jax.experimental.pallas import tpu as pltpu

IN_DIM = 3 * 32 * 32            # 3072
DIMS = (IN_DIM, 256, 128, 64, 10)


def _round_up(n, m):
    return ((n + m - 1) // m) * m


# --------------------------------------------------------------------------
# Kernel
# --------------------------------------------------------------------------
def classifier_kernel(x_ref,
                      w1_ref, b1_ref,
                      w2_ref, b2_ref,
                      w3_ref, b3_ref,
                      w4_ref, b4_ref,
                      o_ref):
    # Cast the x tile in-kernel (VPU, free vs. an extra HBM pass in the wrapper).
    x = x_ref[...].astype(jnp.bfloat16)

    # fc1 + relu  (bf16 operands, f32 accumulation)
    h = jnp.dot(x, w1_ref[...], preferred_element_type=jnp.float32) + b1_ref[...]
    h = jnp.maximum(h, 0.0).astype(jnp.bfloat16)

    # fc2 + relu
    h = jnp.dot(h, w2_ref[...], preferred_element_type=jnp.float32) + b2_ref[...]
    h = jnp.maximum(h, 0.0).astype(jnp.bfloat16)

    # fc3 + relu
    h = jnp.dot(h, w3_ref[...], preferred_element_type=jnp.float32) + b3_ref[...]
    h = jnp.maximum(h, 0.0).astype(jnp.bfloat16)

    # fc4
    logits = jnp.dot(h, w4_ref[...], preferred_element_type=jnp.float32) + b4_ref[...]

    # log_softmax over dim=1 (numerically stable, f32)
    m = jnp.max(logits, axis=-1, keepdims=True)
    shifted = logits - m
    lse = jnp.log(jnp.sum(jnp.exp(shifted), axis=-1, keepdims=True))
    o_ref[...] = (shifted - lse).astype(o_ref.dtype)


# --------------------------------------------------------------------------
# Wrapper
# --------------------------------------------------------------------------
def _select_tile(batch, tb):
    """Batch tile: <= tb, multiple of 16 (bf16 sublane), grid >= 2 when possible
    so the 'parallel' axis splits across v7x's two TensorCores."""
    TB = min(tb, max(16, _round_up(pl.cdiv(batch, 2), 16)))
    if TB >= batch:
        TB = batch          # single exact block (block dims == array dims: legal)
    return TB


def _vmem_budget_bytes(TB, x_itemsize):
    x_bufs = 2 * TB * IN_DIM * x_itemsize                                 # double-buffered x
    w_bufs = 2 * 2 * sum(a * b for a, b in zip(DIMS[:-1], DIMS[1:]))      # bf16 weights, 2 bufs
    out_bufs = 2 * TB * 128 * 4                                           # lane-padded f32 out
    headroom = 8 << 20                                                    # intermediates/scratch
    budget = x_bufs + w_bufs + out_bufs + headroom
    return int(min(max(budget, 32 << 20), 96 << 20))


def classifier_forward(x, prepared, tb=1024):
    """x: (B, 3, 32, 32) or (3, 32, 32), any float dtype.
    prepared: output of prepare_params() (transposed bf16 weights, f32 biases)."""
    if x.ndim == 4:
        xf = x.reshape(x.shape[0], -1)
    else:
        xf = x.reshape(1, -1)
    B = xf.shape[0]

    TB = _select_tile(B, tb)
    grid = (pl.cdiv(B, TB),)      # ragged last block handled by Pallas masking

    w1, b1 = prepared["w1"], prepared["b1"]
    w2, b2 = prepared["w2"], prepared["b2"]
    w3, b3 = prepared["w3"], prepared["b3"]
    w4, b4 = prepared["w4"], prepared["b4"]

    def resident(shape):
        # Same block every grid step -> stays VMEM-resident across iterations.
        return pl.BlockSpec(shape, lambda i: (0, 0))

    in_specs = [
        pl.BlockSpec((TB, IN_DIM), lambda i: (i, 0)),      # x tile (pipelined)
        resident((DIMS[0], DIMS[1])), resident((1, DIMS[1])),
        resident((DIMS[1], DIMS[2])), resident((1, DIMS[2])),
        resident((DIMS[2], DIMS[3])), resident((1, DIMS[3])),
        resident((DIMS[3], DIMS[4])), resident((1, DIMS[4])),
    ]
    out_specs = pl.BlockSpec((TB, DIMS[4]), lambda i: (i, 0))

    flops = 2 * B * sum(a * b for a, b in zip(DIMS[:-1], DIMS[1:]))
    bytes_accessed = (B * IN_DIM * x.dtype.itemsize                          # x
                      + sum(a * b for a, b in zip(DIMS[:-1], DIMS[1:])) * 2  # weights (bf16)
                      + sum(DIMS[1:]) * 4                                    # biases (f32)
                      + B * DIMS[4] * 4)                                     # out (f32)
    cost = pl.CostEstimate(flops=flops,
                           transcendentals=B * (DIMS[4] + 1),
                           bytes_accessed=bytes_accessed)

    out = pl.pallas_call(
        classifier_kernel,
        out_shape=jax.ShapeDtypeStruct((B, DIMS[4]), jnp.float32),
        grid=grid,
        in_specs=in_specs,
        out_specs=out_specs,
        compiler_params=pltpu.CompilerParams(
            dimension_semantics=("parallel",),
            vmem_limit_bytes=_vmem_budget_bytes(TB, x.dtype.itemsize),
        ),
        cost_estimate=cost,
    )(xf, w1, b1, w2, b2, w3, b3, w4, b4)
    return out


def prepare_params(params):
    """One-time prep: PyTorch-convention (out, in) f32 weights -> (in, out) bf16;
    biases -> (1, out) f32.  Do this once, not per forward call."""
    prepared = {}
    for i in range(1, 5):
        prepared[f"w{i}"] = jnp.asarray(params[f"w{i}"]).T.astype(jnp.bfloat16)
        prepared[f"b{i}"] = jnp.asarray(params[f"b{i}"]).reshape(1, -1).astype(jnp.float32)
    return prepared


# --------------------------------------------------------------------------
# Init + references
# --------------------------------------------------------------------------
def init_params(key):
    """Deterministic init mimicking nn.Linear default (uniform(-1/sqrt(in), 1/sqrt(in)))."""
    shapes = [(256, 3072), (128, 256), (64, 128), (10, 64)]
    params = {}
    keys = jax.random.split(key, 2 * len(shapes))
    for i, (out_d, in_d) in enumerate(shapes):
        bound = 1.0 / jnp.sqrt(in_d)
        params[f"w{i+1}"] = jax.random.uniform(
            keys[2 * i], (out_d, in_d), jnp.float32, -bound, bound)
        params[f"b{i+1}"] = jax.random.uniform(
            keys[2 * i + 1], (out_d,), jnp.float32, -bound, bound)
    return params


def reference_forward_f32(x, params):
    """Pure-f32 reference (exact PyTorch semantics)."""
    xf = (x.reshape(x.shape[0], -1) if x.ndim == 4 else x.reshape(1, -1)).astype(jnp.float32)
    h = jax.nn.relu(xf @ params["w1"].T + params["b1"])
    h = jax.nn.relu(h @ params["w2"].T + params["b2"])
    h = jax.nn.relu(h @ params["w3"].T + params["b3"])
    logits = h @ params["w4"].T + params["b4"]
    return jax.nn.log_softmax(logits, axis=1)


def reference_forward_matched(x, params):
    """Reference matching the kernel's bf16-operand / f32-accumulation precision."""
    xf = (x.reshape(x.shape[0], -1) if x.ndim == 4 else x.reshape(1, -1)).astype(jnp.bfloat16)
    h = xf
    for i in range(1, 5):
        w = params[f"w{i}"].T.astype(jnp.bfloat16)
        b = params[f"b{i}"].astype(jnp.float32)
        h = jnp.dot(h, w, preferred_element_type=jnp.float32) + b
        if i < 4:
            h = jnp.maximum(h, 0.0).astype(jnp.bfloat16)
    return jax.nn.log_softmax(h, axis=1)


# --------------------------------------------------------------------------
# Main
# --------------------------------------------------------------------------
if __name__ == "__main__":
    key = jax.random.PRNGKey(0)
    k_param, k_x = jax.random.split(key)
    params = init_params(k_param)
    prepared = prepare_params(params)       # one-time weight transpose/cast

    # Small batch; channel/spatial dims are fixed by fc1 (3*32*32 = 3072).
    x = jax.random.normal(k_x, (2, 3, 32, 32), jnp.float32)

    fwd = jax.jit(classifier_forward, static_argnames=("tb",))
    out = fwd(x, prepared, tb=1024)
    out = jax.block_until_ready(out)
    assert out.shape == (2, 10)
    assert bool(jnp.all(jnp.isfinite(out)))

    # Tight check vs a reference with the same bf16/f32 mixed precision.
    ref_matched = reference_forward_matched(x, params)
    assert jnp.allclose(out, ref_matched, atol=2e-2, rtol=2e-2), \
        "mismatch vs matched-precision reference"

    # Loose sanity check vs the full-f32 PyTorch-semantics reference.
    ref_f32 = reference_forward_f32(x, params)
    assert jnp.allclose(out, ref_f32, atol=5e-2, rtol=5e-2), "mismatch vs f32 reference"

    print("KERNEL_OK")
</pallas_src>

<mosaic_0001>
module attributes {stable_mosaic.version = 11 : i64} {
  func.func @classifier_kernel(%arg0: i32, %arg1: memref<2x3072xf32, #tpu.memory_space<vmem>>, %arg2: memref<3072x256xbf16, #tpu.memory_space<vmem>>, %arg3: memref<1x256xf32, #tpu.memory_space<vmem>>, %arg4: memref<256x128xbf16, #tpu.memory_space<vmem>>, %arg5: memref<1x128xf32, #tpu.memory_space<vmem>>, %arg6: memref<128x64xbf16, #tpu.memory_space<vmem>>, %arg7: memref<1x64xf32, #tpu.memory_space<vmem>>, %arg8: memref<64x10xbf16, #tpu.memory_space<vmem>>, %arg9: memref<1x10xf32, #tpu.memory_space<vmem>>, %arg10: memref<2x10xf32, #tpu.memory_space<vmem>>) attributes {dimension_semantics = [#tpu.dimension_semantics<parallel>], iteration_bounds = array<i64: 1>, scalar_prefetch = 0 : i64, scratch_operands = 0 : i64, tpu.core_type = #tpu.core_type<tc>, window_params = [{transform_indices = @transform_0, window_bounds = array<i64: 2, 3072>}, {pipeline_mode = #tpu.pipeline_mode<synchronous>, transform_indices = @transform_1, window_bounds = array<i64: 3072, 256>}, {pipeline_mode = #tpu.pipeline_mode<synchronous>, transform_indices = @transform_2, window_bounds = array<i64: 1, 256>}, {pipeline_mode = #tpu.pipeline_mode<synchronous>, transform_indices = @transform_3, window_bounds = array<i64: 256, 128>}, {pipeline_mode = #tpu.pipeline_mode<synchronous>, transform_indices = @transform_4, window_bounds = array<i64: 1, 128>}, {pipeline_mode = #tpu.pipeline_mode<synchronous>, transform_indices = @transform_5, window_bounds = array<i64: 128, 64>}, {pipeline_mode = #tpu.pipeline_mode<synchronous>, transform_indices = @transform_6, window_bounds = array<i64: 1, 64>}, {pipeline_mode = #tpu.pipeline_mode<synchronous>, transform_indices = @transform_7, window_bounds = array<i64: 64, 10>}, {pipeline_mode = #tpu.pipeline_mode<synchronous>, transform_indices = @transform_8, window_bounds = array<i64: 1, 10>}, {transform_indices = @transform_9, window_bounds = array<i64: 2, 10>}]} {
    %c0 = arith.constant 0 : index
    %c0_0 = arith.constant 0 : index
    %0 = vector.load %arg1[%c0, %c0_0] : memref<2x3072xf32, #tpu.memory_space<vmem>>, vector<2x3072xf32>
    %1 = arith.truncf %0 : vector<2x3072xf32> to vector<2x3072xbf16>
    %c0_1 = arith.constant 0 : index
    %c0_2 = arith.constant 0 : index
    %2 = vector.load %arg2[%c0_1, %c0_2] : memref<3072x256xbf16, #tpu.memory_space<vmem>>, vector<3072x256xbf16>
    %cst = arith.constant dense<0.000000e+00> : vector<2x256xf32>
    %3 = tpu.matmul %1, %2, %cst {dimension_numbers = #tpu.dot_dimension_numbers<[1], [0], [0], [1], [0, 0, 1, 1], [], []>} : vector<2x3072xbf16>, vector<3072x256xbf16>, vector<2x256xf32> -> vector<2x256xf32>
    %c0_3 = arith.constant 0 : index
    %c0_4 = arith.constant 0 : index
    %4 = vector.load %arg3[%c0_3, %c0_4] : memref<1x256xf32, #tpu.memory_space<vmem>>, vector<1x256xf32>
    %5 = vector.broadcast %4 : vector<1x256xf32> to vector<2x256xf32>
    %6 = arith.addf %3, %5 : vector<2x256xf32>
    %cst_5 = arith.constant 0.000000e+00 : f32
    %7 = vector.broadcast %cst_5 : f32 to vector<2x256xf32>
    %8 = arith.maximumf %6, %7 : vector<2x256xf32>
    %9 = arith.truncf %8 : vector<2x256xf32> to vector<2x256xbf16>
    %c0_6 = arith.constant 0 : index
    %c0_7 = arith.constant 0 : index
    %10 = vector.load %arg4[%c0_6, %c0_7] : memref<256x128xbf16, #tpu.memory_space<vmem>>, vector<256x128xbf16>
    %cst_8 = arith.constant dense<0.000000e+00> : vector<2x128xf32>
    %11 = tpu.matmul %9, %10, %cst_8 {dimension_numbers = #tpu.dot_dimension_numbers<[1], [0], [0], [1], [0, 0, 1, 1], [], []>} : vector<2x256xbf16>, vector<256x128xbf16>, vector<2x128xf32> -> vector<2x128xf32>
    %c0_9 = arith.constant 0 : index
    %c0_10 = arith.constant 0 : index
    %12 = vector.load %arg5[%c0_9, %c0_10] : memref<1x128xf32, #tpu.memory_space<vmem>>, vector<1x128xf32>
    %13 = vector.broadcast %12 : vector<1x128xf32> to vector<2x128xf32>
    %14 = arith.addf %11, %13 : vector<2x128xf32>
    %cst_11 = arith.constant 0.000000e+00 : f32
    %15 = vector.broadcast %cst_11 : f32 to vector<2x128xf32>
    %16 = arith.maximumf %14, %15 : vector<2x128xf32>
    %17 = arith.truncf %16 : vector<2x128xf32> to vector<2x128xbf16>
    %c0_12 = arith.constant 0 : index
    %c0_13 = arith.constant 0 : index
    %18 = vector.load %arg6[%c0_12, %c0_13] : memref<128x64xbf16, #tpu.memory_space<vmem>>, vector<128x64xbf16>
    %cst_14 = arith.constant dense<0.000000e+00> : vector<2x64xf32>
    %19 = tpu.matmul %17, %18, %cst_14 {dimension_numbers = #tpu.dot_dimension_numbers<[1], [0], [0], [1], [0, 0, 1, 1], [], []>} : vector<2x128xbf16>, vector<128x64xbf16>, vector<2x64xf32> -> vector<2x64xf32>
    %c0_15 = arith.constant 0 : index
    %c0_16 = arith.constant 0 : index
    %20 = vector.load %arg7[%c0_15, %c0_16] : memref<1x64xf32, #tpu.memory_space<vmem>>, vector<1x64xf32>
    %21 = vector.broadcast %20 : vector<1x64xf32> to vector<2x64xf32>
    %22 = arith.addf %19, %21 : vector<2x64xf32>
    %cst_17 = arith.constant 0.000000e+00 : f32
    %23 = vector.broadcast %cst_17 : f32 to vector<2x64xf32>
    %24 = arith.maximumf %22, %23 : vector<2x64xf32>
    %25 = arith.truncf %24 : vector<2x64xf32> to vector<2x64xbf16>
    %c0_18 = arith.constant 0 : index
    %c0_19 = arith.constant 0 : index
    %26 = vector.load %arg8[%c0_18, %c0_19] : memref<64x10xbf16, #tpu.memory_space<vmem>>, vector<64x10xbf16>
    %cst_20 = arith.constant dense<0.000000e+00> : vector<2x10xf32>
    %27 = tpu.matmul %25, %26, %cst_20 {dimension_numbers = #tpu.dot_dimension_numbers<[1], [0], [0], [1], [0, 0, 1, 1], [], []>} : vector<2x64xbf16>, vector<64x10xbf16>, vector<2x10xf32> -> vector<2x10xf32>
    %c0_21 = arith.constant 0 : index
    %c0_22 = arith.constant 0 : index
    %28 = vector.load %arg9[%c0_21, %c0_22] : memref<1x10xf32, #tpu.memory_space<vmem>>, vector<1x10xf32>
    %29 = vector.broadcast %28 : vector<1x10xf32> to vector<2x10xf32>
    %30 = arith.addf %27, %29 : vector<2x10xf32>
    %cst_23 = arith.constant dense<0xFF800000> : vector<2xf32>
    %31 = vector.multi_reduction <maximumf>, %30, %cst_23 [1] : vector<2x10xf32> to vector<2xf32>
    %32 = vector.shape_cast %31 : vector<2xf32> to vector<2x1xf32>
    %33 = vector.broadcast %32 : vector<2x1xf32> to vector<2x10xf32>
    %34 = arith.subf %30, %33 : vector<2x10xf32>
    %35 = math.exp %34 : vector<2x10xf32>
    %cst_24 = arith.constant dense<0.000000e+00> : vector<2xf32>
    %36 = vector.multi_reduction <add>, %35, %cst_24 [1] : vector<2x10xf32> to vector<2xf32>
    %37 = vector.shape_cast %36 : vector<2xf32> to vector<2x1xf32>
    %38 = math.log %37 : vector<2x1xf32>
    %39 = vector.broadcast %38 : vector<2x1xf32> to vector<2x10xf32>
    %40 = arith.subf %34, %39 : vector<2x10xf32>
    %c0_25 = arith.constant 0 : index
    %c0_26 = arith.constant 0 : index
    %41 = vector.load %arg10[%c0_25, %c0_26] : memref<2x10xf32, #tpu.memory_space<vmem>>, vector<2x10xf32>
    tpu.vector_store %arg10[%c0_25, %c0_26], %40 {strides = array<i32>} : memref<2x10xf32, #tpu.memory_space<vmem>>, vector<2x10xf32>,
    return
  }
  func.func @transform_0(%arg0: i32) -> (i32, i32) {
    %c0_i32 = arith.constant 0 : i32
    %c0_i32_0 = arith.constant 0 : i32
    return %arg0, %c0_i32 : i32, i32
  }
  func.func @transform_1(%arg0: i32) -> (i32, i32) {
    %c0_i32 = arith.constant 0 : i32
    %c0_i32_0 = arith.constant 0 : i32
    %c0_i32_1 = arith.constant 0 : i32
    return %c0_i32, %c0_i32_0 : i32, i32
  }
  func.func @transform_2(%arg0: i32) -> (i32, i32) {
    %c0_i32 = arith.constant 0 : i32
    %c0_i32_0 = arith.constant 0 : i32
    %c0_i32_1 = arith.constant 0 : i32
    return %c0_i32, %c0_i32_0 : i32, i32
  }
  func.func @transform_3(%arg0: i32) -> (i32, i32) {
    %c0_i32 = arith.constant 0 : i32
    %c0_i32_0 = arith.constant 0 : i32
    %c0_i32_1 = arith.constant 0 : i32
    return %c0_i32, %c0_i32_0 : i32, i32
  }
  func.func @transform_4(%arg0: i32) -> (i32, i32) {
    %c0_i32 = arith.constant 0 : i32
    %c0_i32_0 = arith.constant 0 : i32
    %c0_i32_1 = arith.constant 0 : i32
    return %c0_i32, %c0_i32_0 : i32, i32
  }
  func.func @transform_5(%arg0: i32) -> (i32, i32) {
    %c0_i32 = arith.constant 0 : i32
    %c0_i32_0 = arith.constant 0 : i32
    %c0_i32_1 = arith.constant 0 : i32
    return %c0_i32, %c0_i32_0 : i32, i32
  }
  func.func @transform_6(%arg0: i32) -> (i32, i32) {
    %c0_i32 = arith.constant 0 : i32
    %c0_i32_0 = arith.constant 0 : i32
    %c0_i32_1 = arith.constant 0 : i32
    return %c0_i32, %c0_i32_0 : i32, i32
  }
  func.func @transform_7(%arg0: i32) -> (i32, i32) {
    %c0_i32 = arith.constant 0 : i32
    %c0_i32_0 = arith.constant 0 : i32
    %c0_i32_1 = arith.constant 0 : i32
    return %c0_i32, %c0_i32_0 : i32, i32
  }
  func.func @transform_8(%arg0: i32) -> (i32, i32) {
    %c0_i32 = arith.constant 0 : i32
    %c0_i32_0 = arith.constant 0 : i32
    %c0_i32_1 = arith.constant 0 : i32
    return %c0_i32, %c0_i32_0 : i32, i32
  }
  func.func @transform_9(%arg0: i32) -> (i32, i32) {
    %c0_i32 = arith.constant 0 : i32
    %c0_i32_0 = arith.constant 0 : i32
    return %arg0, %c0_i32 : i32, i32
  }
}

</mosaic_0001>

<llo_original>
// kernel: classifier_forward.1
$region0: #{classifier_forward.1}
  #allocation0 [shape = 'u32[]', space=smem, size = 0x4, offset = 0x4, fixed_abs, tag = 'smem constant byte address 0x4 - core index']
  #allocation1 [shape = 'u32[72,128]{1,0:T(1,128)}', space=vmem, size = 0x9000, scoped, tag = 'internal scratch']
  %s0 = inlined_call_operand.vmem [shape: f32[2,3072], index: 0, kind: input, shape index: {}]
  %s1 = inlined_call_operand.hbm [shape: bf16[3072,256], index: 1, kind: input, shape index: {}]
  %s2 = inlined_call_operand.hbm [shape: f32[1,256], index: 2, kind: input, shape index: {}]
  %s3 = inlined_call_operand.hbm [shape: bf16[256,128], index: 3, kind: input, shape index: {}]
  %s4 = inlined_call_operand.hbm [shape: f32[1,128], index: 4, kind: input, shape index: {}]
  %s5 = inlined_call_operand.vmem [shape: bf16[128,64], index: 5, kind: input, shape index: {}]
  %s6 = inlined_call_operand.hbm [shape: f32[1,64], index: 6, kind: input, shape index: {}]
  %s7 = inlined_call_operand.vmem [shape: bf16[64,10], index: 7, kind: input, shape index: {}]
  %s8 = inlined_call_operand.hbm [shape: f32[1,10], index: 8, kind: input, shape index: {}]
  %s9 = inlined_call_operand.hbm [shape: f32[2,10], index: 9, kind: output, shape index: {}]
  %s10 = sld [smem:[#allocation0]]
  $region70: #{classifier_forward.1} parent=0
    _
  %s12 = ssub.s32 1, %s10
  %s13 = scalar_select 0, %s12, %s10
  $region1: #{classifier_forward.1} parent=0
    #allocation2 [shape = 'u8[1572864]{0}', space=vmem, size = 0x180000, scoped, tag = 'input window, operand 1, single buffered']
    #allocation3 [shape = 's32[1]{0}', space=sflag, size = 0x4, scoped, tag = 'scoped memory for classifier_forward.1']
    #allocation4 [shape = 's32[1]{0}', space=sflag, size = 0x4, scoped, tag = 'scoped memory for classifier_forward.1']
    #allocation5 [shape = 'u8[1024]{0}', space=vmem, size = 0x400, scoped, tag = 'input window, operand 2, single buffered']
    #allocation6 [shape = 's32[1]{0}', space=sflag, size = 0x4, scoped, tag = 'scoped memory for classifier_forward.1']
    #allocation7 [shape = 'u8[65536]{0}', space=vmem, size = 0x10000, scoped, tag = 'input window, operand 3, single buffered']
    #allocation8 [shape = 'u8[512]{0}', space=vmem, size = 0x400, scoped, tag = 'input window, operand 4, single buffered']
    #allocation9 [shape = 's32[1]{0}', space=sflag, size = 0x4, scoped, tag = 'scoped memory for classifier_forward.1']
    #allocation10 [shape = 'u8[512]{0}', space=vmem, size = 0x400, scoped, tag = 'input window, operand 6, single buffered']
    #allocation11 [shape = 'u8[512]{0}', space=vmem, size = 0x400, scoped, tag = 'input window, operand 8, single buffered']
    #allocation12 [shape = 's32[1]{0}', space=sflag, size = 0x4, scoped, tag = 'scoped memory for classifier_forward.1']
    #allocation13 [shape = 'u8[1024]{0}', space=vmem, size = 0x400, scoped, tag = 'output window, operand 0, single buffered']
    %14 = vsyncpa [#allocation3], 0
    %15 = vsyncpa [#allocation6], 0
    %16 = vsyncpa [#allocation9], 0
    %17 = vsyncpa [#allocation12], 0
    %18 = vsyncpa [#allocation4], 0
    // Predicated region
    $region2: #{classifier_forward.1} parent=1 // pred_check
      _
    $region3: #{classifier_forward.1} parent=1 // pred_check_branch
      %20 = sbr.rel (0) target = $region5
    $region4: #{classifier_forward.1} parent=1 // pred_region
      _
    $region5: #{classifier_forward.1} parent=1 // pred_fallthru
      _
    // Predicated region
    $region6: #{classifier_forward.1} parent=1 // pred_check
      _
    $region7: #{classifier_forward.1} parent=1 // pred_check_branch
      %22 = sbr.rel (0) target = $region9
    $region8: #{classifier_forward.1} parent=1 // pred_region
      %24 = vsyncadd [#allocation3], 0
      %s25 = sshll.u32 %s1, 4
      %s26 = int_to_ptr.hbm [resolvable:$true] %s25
      %s27 = sshll.u32 [#allocation2], 4
      %s28 = int_to_ptr.vmem [resolvable:$true] %s27
      %33 = dma.hbm_to_vmem [thread:$0]  %s26, 49152, %s28, [#allocation3], 128, 128, 8
    $region9: #{classifier_forward.1} parent=1 // pred_fallthru
      _
    // Predicated region
    $region10: #{classifier_forward.1} parent=1 // pred_check
      _
    $region11: #{classifier_forward.1} parent=1 // pred_check_branch
      %35 = sbr.rel (0) target = $region13
    $region12: #{classifier_forward.1} parent=1 // pred_region
      %37 = vsyncadd [#allocation6], 0
      %s39 = sshll.u32 %s2, 4
      %s40 = int_to_ptr.hbm [resolvable:$true] %s39
      %s41 = sshll.u32 [#allocation5], 4
      %s42 = int_to_ptr.vmem [resolvable:$true] %s41
      %44 = dma.hbm_to_vmem [thread:$0]  %s40, 32, %s42, [#allocation6]
    $region13: #{classifier_forward.1} parent=1 // pred_fallthru
      _
    // Predicated region
    $region14: #{classifier_forward.1} parent=1 // pred_check
      _
    $region15: #{classifier_forward.1} parent=1 // pred_check_branch
      %46 = sbr.rel (0) target = $region17
    $region16: #{classifier_forward.1} parent=1 // pred_region
      %48 = vsyncadd [#allocation6], 0
      %s49 = sshll.u32 %s3, 4
      %s50 = int_to_ptr.hbm [resolvable:$true] %s49
      %s51 = sshll.u32 [#allocation7], 4
      %s52 = int_to_ptr.vmem [resolvable:$true] %s51
      %57 = dma.hbm_to_vmem [thread:$0]  %s50, 2048, %s52, [#allocation6], 64, 64, 4
    $region17: #{classifier_forward.1} parent=1 // pred_fallthru
      _
    // Predicated region
    $region18: #{classifier_forward.1} parent=1 // pred_check
      _
    $region19: #{classifier_forward.1} parent=1 // pred_check_branch
      %59 = sbr.rel (0) target = $region21
    $region20: #{classifier_forward.1} parent=1 // pred_region
      %61 = vsyncadd [#allocation9], 0
      %s63 = sshll.u32 %s4, 4
      %s64 = int_to_ptr.hbm [resolvable:$true] %s63
      %s65 = sshll.u32 [#allocation8], 4
      %s66 = int_to_ptr.vmem [resolvable:$true] %s65
      %68 = dma.hbm_to_vmem [thread:$0]  %s64, 16, %s66, [#allocation9]
    $region21: #{classifier_forward.1} parent=1 // pred_fallthru
      _
    // Predicated region
    $region22: #{classifier_forward.1} parent=1 // pred_check
      _
    $region23: #{classifier_forward.1} parent=1 // pred_check_branch
      %70 = sbr.rel (0) target = $region25
    $region24: #{classifier_forward.1} parent=1 // pred_region
      _
    $region25: #{classifier_forward.1} parent=1 // pred_fallthru
      _
    // Predicated region
    $region26: #{classifier_forward.1} parent=1 // pred_check
      _
    $region27: #{classifier_forward.1} parent=1 // pred_check_branch
      %72 = sbr.rel (0) target = $region29
    $region28: #{classifier_forward.1} parent=1 // pred_region
      %74 = vsyncadd [#allocation9], 0
      %s76 = sshll.u32 %s6, 4
      %s77 = int_to_ptr.hbm [resolvable:$true] %s76
      %s78 = sshll.u32 [#allocation10], 4
      %s79 = int_to_ptr.vmem [resolvable:$true] %s78
      %81 = dma.hbm_to_vmem [thread:$0]  %s77, 16, %s79, [#allocation9]
    $region29: #{classifier_forward.1} parent=1 // pred_fallthru
      _
    // Predicated region
    $region30: #{classifier_forward.1} parent=1 // pred_check
      _
    $region31: #{classifier_forward.1} parent=1 // pred_check_branch
      %83 = sbr.rel (0) target = $region33
    $region32: #{classifier_forward.1} parent=1 // pred_region
      _
    $region33: #{classifier_forward.1} parent=1 // pred_fallthru
      _
    // Predicated region
    $region34: #{classifier_forward.1} parent=1 // pred_check
      _
    $region35: #{classifier_forward.1} parent=1 // pred_check_branch
      %85 = sbr.rel (0) target = $region37
    $region36: #{classifier_forward.1} parent=1 // pred_region
      %87 = vsyncadd [#allocation12], 0
      %s89 = sshll.u32 %s8, 4
      %s90 = int_to_ptr.hbm [resolvable:$true] %s89
      %s91 = sshll.u32 [#allocation11], 4
      %s92 = int_to_ptr.vmem [resolvable:$true] %s91
      %94 = dma.hbm_to_vmem [thread:$0]  %s90, 16, %s92, [#allocation12]
    $region37: #{classifier_forward.1} parent=1 // pred_fallthru
      _
    // Predicated region
    $region38: #{classifier_forward.1} parent=1 // pred_check
      _
    $region39: #{classifier_forward.1} parent=1 // pred_check_branch
      %96 = sbr.rel (0) target = $region41
    $region40: #{classifier_forward.1} parent=1 // pred_region
      %98 = dma.done [#allocation3], 49152
    $region41: #{classifier_forward.1} parent=1 // pred_fallthru
      _
    // Predicated region
    $region42: #{classifier_forward.1} parent=1 // pred_check
      _
    $region43: #{classifier_forward.1} parent=1 // pred_check_branch
      %100 = sbr.rel (0) target = $region45
    $region44: #{classifier_forward.1} parent=1 // pred_region
      %102 = dma.done [#allocation6], 32
    $region45: #{classifier_forward.1} parent=1 // pred_fallthru
      _
    // Predicated region
    $region46: #{classifier_forward.1} parent=1 // pred_check
      _
    $region47: #{classifier_forward.1} parent=1 // pred_check_branch
      %104 = sbr.rel (0) target = $region49
    $region48: #{classifier_forward.1} parent=1 // pred_region
      %106 = dma.done [#allocation6], 2048
    $region49: #{classifier_forward.1} parent=1 // pred_fallthru
      _
    // Predicated region
    $region50: #{classifier_forward.1} parent=1 // pred_check
      _
    $region51: #{classifier_forward.1} parent=1 // pred_check_branch
      %108 = sbr.rel (0) target = $region53
    $region52: #{classifier_forward.1} parent=1 // pred_region
      %110 = dma.done [#allocation9], 16
    $region53: #{classifier_forward.1} parent=1 // pred_fallthru
      _
    // Predicated region
    $region54: #{classifier_forward.1} parent=1 // pred_check
      _
    $region55: #{classifier_forward.1} parent=1 // pred_check_branch
      %112 = sbr.rel (0) target = $region57
    $region56: #{classifier_forward.1} parent=1 // pred_region
      %114 = dma.done [#allocation9], 16
    $region57: #{classifier_forward.1} parent=1 // pred_fallthru
      _
    // Predicated region
    $region58: #{classifier_forward.1} parent=1 // pred_check
      _
    $region59: #{classifier_forward.1} parent=1 // pred_check_branch
      %116 = sbr.rel (0) target = $region61
    $region60: #{classifier_forward.1} parent=1 // pred_region
      %118 = dma.done [#allocation12], 16
    $region61: #{classifier_forward.1} parent=1 // pred_fallthru
      _
    %v120 = vld [vmem:[%s0] sm:$0xff]
    %v121 = vld [vmem:[%s0 + $0x8] sm:$0xff]
    %v122 = vld [vmem:[%s0 + $0x10] sm:$0xff]
    %v123 = vld [vmem:[%s0 + $0x18] sm:$0xff]
    %v124 = vld [vmem:[%s0 + $0x20] sm:$0xff]
    %v125 = vld [vmem:[%s0 + $0x28] sm:$0xff]
    %132 = vst [vmem:[#allocation1] ss:$4 sm:$0xff] %v120
    %s133 = scalar_lea.vmem [#allocation1], 32
    %134 = vst [vmem:[%s133] ss:$4 sm:$0xff] %v121
    %v135 = vld.sshfl [vmem:[#allocation1] sm:$0xff pattern:$0x73625140]
    %v136 = vld.sshfl [vmem:[#allocation1 + $0x8] sm:$0xff pattern:$0x73625140]
    %v137 = vld.sshfl [vmem:[#allocation1 + $0x10] sm:$0xff pattern:$0x73625140]
    %v138 = vld.sshfl [vmem:[#allocation1 + $0x18] sm:$0xff pattern:$0x73625140]
    %v139 = vld.sshfl [vmem:[#allocation1 + $0x20] sm:$0xff pattern:$0x73625140]
    %v140 = vld.sshfl [vmem:[#allocation1 + $0x28] sm:$0xff pattern:$0x73625140]
    %v141 = vld.sshfl [vmem:[#allocation1 + $0x30] sm:$0xff pattern:$0x73625140]
    %v142 = vld.sshfl [vmem:[#allocation1 + $0x38] sm:$0xff pattern:$0x73625140]
    %143 = vst [vmem:[#allocation1] ss:$4 sm:$0xff] %v122
    %144 = vst [vmem:[%s133] ss:$4 sm:$0xff] %v123
    %v145 = vld.sshfl [vmem:[#allocation1] sm:$0xff pattern:$0x73625140]
    %v146 = vld.sshfl [vmem:[#allocation1 + $0x8] sm:$0xff pattern:$0x73625140]
    %v147 = vld.sshfl [vmem:[#allocation1 + $0x10] sm:$0xff pattern:$0x73625140]
    %v148 = vld.sshfl [vmem:[#allocation1 + $0x18] sm:$0xff pattern:$0x73625140]
    %v149 = vld.sshfl [vmem:[#allocation1 + $0x20] sm:$0xff pattern:$0x73625140]
    %v150 = vld.sshfl [vmem:[#allocation1 + $0x28] sm:$0xff pattern:$0x73625140]
    %v151 = vld.sshfl [vmem:[#allocation1 + $0x30] sm:$0xff pattern:$0x73625140]
    %v152 = vld.sshfl [vmem:[#allocation1 + $0x38] sm:$0xff pattern:$0x73625140]
    %153 = vst [vmem:[#allocation1] ss:$4 sm:$0xff] %v124
    %154 = vst [vmem:[%s133] ss:$4 sm:$0xff] %v125
    %v155 = vld.sshfl [vmem:[#allocation1] sm:$0xff pattern:$0x73625140]
    %v156 = vld.sshfl [vmem:[#allocation1 + $0x8] sm:$0xff pattern:$0x73625140]
    %v157 = vld.sshfl [vmem:[#allocation1 + $0x10] sm:$0xff pattern:$0x73625140]
    %v158 = vld.sshfl [vmem:[#allocation1 + $0x18] sm:$0xff pattern:$0x73625140]
    %v159 = vld.sshfl [vmem:[#allocation1 + $0x20] sm:$0xff pattern:$0x73625140]
    %v160 = vld.sshfl [vmem:[#allocation1 + $0x28] sm:$0xff pattern:$0x73625140]
    %v161 = vld.sshfl [vmem:[#allocation1 + $0x30] sm:$0xff pattern:$0x73625140]
    %v162 = vld.sshfl [vmem:[#allocation1 + $0x38] sm:$0xff pattern:$0x73625140]
    %v187 = vpack.c.bf16 %v135, %v135
    %v188 = vpack.c.bf16 %v136, %v136
    %v189 = vpack.c.bf16 %v137, %v137
    %v190 = vpack.c.bf16 %v138, %v138
    %v191 = vpack.c.bf16 %v139, %v139
    %v192 = vpack.c.bf16 %v140, %v140
    %v193 = vpack.c.bf16 %v141, %v141
    %v194 = vpack.c.bf16 %v142, %v142
    %v195 = vpack.c.bf16 %v145, %v145
    %v196 = vpack.c.bf16 %v146, %v146
    %v197 = vpack.c.bf16 %v147, %v147
    %v198 = vpack.c.bf16 %v148, %v148
    %v199 = vpack.c.bf16 %v149, %v149
    %v200 = vpack.c.bf16 %v150, %v150
    %v201 = vpack.c.bf16 %v151, %v151
    %v202 = vpack.c.bf16 %v152, %v152
    %v203 = vpack.c.bf16 %v155, %v155
    %v204 = vpack.c.bf16 %v156, %v156
    %v205 = vpack.c.bf16 %v157, %v157
    %v206 = vpack.c.bf16 %v158, %v158
    %v207 = vpack.c.bf16 %v159, %v159
    %v208 = vpack.c.bf16 %v160, %v160
    %v209 = vpack.c.bf16 %v161, %v161
    %v210 = vpack.c.bf16 %v162, %v162
    %v211 = vld [vmem:[#allocation2] sm:$0xff]
    %v212 = vld [vmem:[#allocation2 + $0x8] sm:$0xff]
    %v213 = vld [vmem:[#allocation2 + $0x10] sm:$0xff]
    %v214 = vld [vmem:[#allocation2 + $0x18] sm:$0xff]
    %v215 = vld [vmem:[#allocation2 + $0x20] sm:$0xff]
    %v216 = vld [vmem:[#allocation2 + $0x28] sm:$0xff]
    %v217 = vld [vmem:[#allocation2 + $0x30] sm:$0xff]
    %v218 = vld [vmem:[#allocation2 + $0x38] sm:$0xff]
    %v219 = vld [vmem:[#allocation2 + $0x40] sm:$0xff]
    %v220 = vld [vmem:[#allocation2 + $0x48] sm:$0xff]
    %v221 = vld [vmem:[#allocation2 + $0x50] sm:$0xff]
    %v222 = vld [vmem:[#allocation2 + $0x58] sm:$0xff]
    %v223 = vld [vmem:[#allocation2 + $0x60] sm:$0xff]
    %v224 = vld [vmem:[#allocation2 + $0x68] sm:$0xff]
    %v225 = vld [vmem:[#allocation2 + $0x70] sm:$0xff]
    %v226 = vld [vmem:[#allocation2 + $0x78] sm:$0xff]
    %v227 = vld [vmem:[#allocation2 + $0x80] sm:$0xff]
    %v228 = vld [vmem:[#allocation2 + $0x88] sm:$0xff]
    %v229 = vld [vmem:[#allocation2 + $0x90] sm:$0xff]
    %v230 = vld [vmem:[#allocation2 + $0x98] sm:$0xff]
    %v231 = vld [vmem:[#allocation2 + $0xa0] sm:$0xff]
    %v232 = vld [vmem:[#allocation2 + $0xa8] sm:$0xff]
    %v233 = vld [vmem:[#allocation2 + $0xb0] sm:$0xff]
    %v234 = vld [vmem:[#allocation2 + $0xb8] sm:$0xff]
    %v235 = vld [vmem:[#allocation2 + $0xc0] sm:$0xff]
    %v236 = vld [vmem:[#allocation2 + $0xc8] sm:$0xff]
    %v237 = vld [vmem:[#allocation2 + $0xd0] sm:$0xff]
    %v238 = vld [vmem:[#allocation2 + $0xd8] sm:$0xff]
    %v239 = vld [vmem:[#allocation2 + $0xe0] sm:$0xff]
    %v240 = vld [vmem:[#allocation2 + $0xe8] sm:$0xff]
    %v241 = vld [vmem:[#allocation2 + $0xf0] sm:$0xff]
    %v242 = vld [vmem:[#allocation2 + $0xf8] sm:$0xff]
    %v243 = vld [vmem:[#allocation2 + $0x100] sm:$0xff]
    %v244 = vld [vmem:[#allocation2 + $0x108] sm:$0xff]
    %v245 = vld [vmem:[#allocation2 + $0x110] sm:$0xff]
    %v246 = vld [vmem:[#allocation2 + $0x118] sm:$0xff]
    %v247 = vld [vmem:[#allocation2 + $0x120] sm:$0xff]
    %v248 = vld [vmem:[#allocation2 + $0x128] sm:$0xff]
    %v249 = vld [vmem:[#allocation2 + $0x130] sm:$0xff]
    %v250 = vld [vmem:[#allocation2 + $0x138] sm:$0xff]
    %v251 = vld [vmem:[#allocation2 + $0x140] sm:$0xff]
    %v252 = vld [vmem:[#allocation2 + $0x148] sm:$0xff]
    %v253 = vld [vmem:[#allocation2 + $0x150] sm:$0xff]
    %v254 = vld [vmem:[#allocation2 + $0x158] sm:$0xff]
    %v255 = vld [vmem:[#allocation2 + $0x160] sm:$0xff]
    %v256 = vld [vmem:[#allocation2 + $0x168] sm:$0xff]
    %v257 = vld [vmem:[#allocation2 + $0x170] sm:$0xff]
    %v258 = vld [vmem:[#allocation2 + $0x178] sm:$0xff]
    %v259 = vld [vmem:[#allocation2 + $0x180] sm:$0xff]
    %v260 = vld [vmem:[#allocation2 + $0x188] sm:$0xff]
    %v261 = vld [vmem:[#allocation2 + $0x190] sm:$0xff]
    %v262 = vld [vmem:[#allocation2 + $0x198] sm:$0xff]
    %v263 = vld [vmem:[#allocation2 + $0x1a0] sm:$0xff]
    %v264 = vld [vmem:[#allocation2 + $0x1a8] sm:$0xff]
    %v265 = vld [vmem:[#allocation2 + $0x1b0] sm:$0xff]
    %v266 = vld [vmem:[#allocation2 + $0x1b8] sm:$0xff]
    %v267 = vld [vmem:[#allocation2 + $0x1c0] sm:$0xff]
    %v268 = vld [vmem:[#allocation2 + $0x1c8] sm:$0xff]
    %v269 = vld [vmem:[#allocation2 + $0x1d0] sm:$0xff]
    %v270 = vld [vmem:[#allocation2 + $0x1d8] sm:$0xff]
    %v271 = vld [vmem:[#allocation2 + $0x1e0] sm:$0xff]
    %v272 = vld [vmem:[#allocation2 + $0x1e8] sm:$0xff]
    %v273 = vld [vmem:[#allocation2 + $0x1f0] sm:$0xff]
    %v274 = vld [vmem:[#allocation2 + $0x1f8] sm:$0xff]
    %v275 = vld [vmem:[#allocation2 + $0x200] sm:$0xff]
    %v276 = vld [vmem:[#allocation2 + $0x208] sm:$0xff]
    %v277 = vld [vmem:[#allocation2 + $0x210] sm:$0xff]
    %v278 = vld [vmem:[#allocation2 + $0x218] sm:$0xff]
    %v279 = vld [vmem:[#allocation2 + $0x220] sm:$0xff]
    %v280 = vld [vmem:[#allocation2 + $0x228] sm:$0xff]
    %v281 = vld [vmem:[#allocation2 + $0x230] sm:$0xff]
    %v282 = vld [vmem:[#allocation2 + $0x238] sm:$0xff]
    %v283 = vld [vmem:[#allocation2 + $0x240] sm:$0xff]
    %v284 = vld [vmem:[#allocation2 + $0x248] sm:$0xff]
    %v285 = vld [vmem:[#allocation2 + $0x250] sm:$0xff]
    %v286 = vld [vmem:[#allocation2 + $0x258] sm:$0xff]
    %v287 = vld [vmem:[#allocation2 + $0x260] sm:$0xff]
    %v288 = vld [vmem:[#allocation2 + $0x268] sm:$0xff]
    %v289 = vld [vmem:[#allocation2 + $0x270] sm:$0xff]
    %v290 = vld [vmem:[#allocation2 + $0x278] sm:$0xff]
    %v291 = vld [vmem:[#allocation2 + $0x280] sm:$0xff]
    %v292 = vld [vmem:[#allocation2 + $0x288] sm:$0xff]
    %v293 = vld [vmem:[#allocation2 + $0x290] sm:$0xff]
    %v294 = vld [vmem:[#allocation2 + $0x298] sm:$0xff]
    %v295 = vld [vmem:[#allocation2 + $0x2a0] sm:$0xff]
    %v296 = vld [vmem:[#allocation2 + $0x2a8] sm:$0xff]
    %v297 = vld [vmem:[#allocation2 + $0x2b0] sm:$0xff]
    %v298 = vld [vmem:[#allocation2 + $0x2b8] sm:$0xff]
    %v299 = vld [vmem:[#allocation2 + $0x2c0] sm:$0xff]
    %v300 = vld [vmem:[#allocation2 + $0x2c8] sm:$0xff]
    %v301 = vld [vmem:[#allocation2 + $0x2d0] sm:$0xff]
    %v302 = vld [vmem:[#allocation2 + $0x2d8] sm:$0xff]
    %v303 = vld [vmem:[#allocation2 + $0x2e0] sm:$0xff]
    %v304 = vld [vmem:[#allocation2 + $0x2e8] sm:$0xff]
    %v305 = vld [vmem:[#allocation2 + $0x2f0] sm:$0xff]
    %v306 = vld [vmem:[#allocation2 + $0x2f8] sm:$0xff]
    %v307 = vld [vmem:[#allocation2 + $0x300] sm:$0xff]
    %v308 = vld [vmem:[#allocation2 + $0x308] sm:$0xff]
    %v309 = vld [vmem:[#allocation2 + $0x310] sm:$0xff]
    %v310 = vld [vmem:[#allocation2 + $0x318] sm:$0xff]
    %v311 = vld [vmem:[#allocation2 + $0x320] sm:$0xff]
    %v312 = vld [vmem:[#allocation2 + $0x328] sm:$0xff]
    %v313 = vld [vmem:[#allocation2 + $0x330] sm:$0xff]
    %v314 = vld [vmem:[#allocation2 + $0x338] sm:$0xff]
    %v315 = vld [vmem:[#allocation2 + $0x340] sm:$0xff]
    %v316 = vld [vmem:[#allocation2 + $0x348] sm:$0xff]
    %v317 = vld [vmem:[#allocation2 + $0x350] sm:$0xff]
    %v318 = vld [vmem:[#allocation2 + $0x358] sm:$0xff]
    %v319 = vld [vmem:[#allocation2 + $0x360] sm:$0xff]
    %v320 = vld [vmem:[#allocation2 + $0x368] sm:$0xff]
    %v321 = vld [vmem:[#allocation2 + $0x370] sm:$0xff]
    %v322 = vld [vmem:[#allocation2 + $0x378] sm:$0xff]
    %v323 = vld [vmem:[#allocation2 + $0x380] sm:$0xff]
    %v324 = vld [vmem:[#allocation2 + $0x388] sm:$0xff]
    %v325 = vld [vmem:[#allocation2 + $0x390] sm:$0xff]
    %v326 = vld [vmem:[#allocation2 + $0x398] sm:$0xff]
    %v327 = vld [vmem:[#allocation2 + $0x3a0] sm:$0xff]
    %v328 = vld [vmem:[#allocation2 + $0x3a8] sm:$0xff]
    %v329 = vld [vmem:[#allocation2 + $0x3b0] sm:$0xff]
    %v330 = vld [vmem:[#allocation2 + $0x3b8] sm:$0xff]
    %v331 = vld [vmem:[#allocation2 + $0x3c0] sm:$0xff]
    %v332 = vld [vmem:[#allocation2 + $0x3c8] sm:$0xff]
    %v333 = vld [vmem:[#allocation2 + $0x3d0] sm:$0xff]
    %v334 = vld [vmem:[#allocation2 + $0x3d8] sm:$0xff]
    %v335 = vld [vmem:[#allocation2 + $0x3e0] sm:$0xff]
    %v336 = vld [vmem:[#allocation2 + $0x3e8] sm:$0xff]
    %v337 = vld [vmem:[#allocation2 + $0x3f0] sm:$0xff]
    %v338 = vld [vmem:[#allocation2 + $0x3f8] sm:$0xff]
    %v339 = vld [vmem:[#allocation2 + $0x400] sm:$0xff]
    %v340 = vld [vmem:[#allocation2 + $0x408] sm:$0xff]
    %v341 = vld [vmem:[#allocation2 + $0x410] sm:$0xff]
    %v342 = vld [vmem:[#allocation2 + $0x418] sm:$0xff]
    %v343 = vld [vmem:[#allocation2 + $0x420] sm:$0xff]
    %v344 = vld [vmem:[#allocation2 + $0x428] sm:$0xff]
    %v345 = vld [vmem:[#allocation2 + $0x430] sm:$0xff]
    %v346 = vld [vmem:[#allocation2 + $0x438] sm:$0xff]
    %v347 = vld [vmem:[#allocation2 + $0x440] sm:$0xff]
    %v348 = vld [vmem:[#allocation2 + $0x448] sm:$0xff]
    %v349 = vld [vmem:[#allocation2 + $0x450] sm:$0xff]
    %v350 = vld [vmem:[#allocation2 + $0x458] sm:$0xff]
    %v351 = vld [vmem:[#allocation2 + $0x460] sm:$0xff]
    %v352 = vld [vmem:[#allocation2 + $0x468] sm:$0xff]
    %v353 = vld [vmem:[#allocation2 + $0x470] sm:$0xff]
    %v354 = vld [vmem:[#allocation2 + $0x478] sm:$0xff]
    %v355 = vld [vmem:[#allocation2 + $0x480] sm:$0xff]
    %v356 = vld [vmem:[#allocation2 + $0x488] sm:$0xff]
    %v357 = vld [vmem:[#allocation2 + $0x490] sm:$0xff]
    %v358 = vld [vmem:[#allocation2 + $0x498] sm:$0xff]
    %v359 = vld [vmem:[#allocation2 + $0x4a0] sm:$0xff]
    %v360 = vld [vmem:[#allocation2 + $0x4a8] sm:$0xff]
    %v361 = vld [vmem:[#allocation2 + $0x4b0] sm:$0xff]
    %v362 = vld [vmem:[#allocation2 + $0x4b8] sm:$0xff]
    %v363 = vld [vmem:[#allocation2 + $0x4c0] sm:$0xff]
    %v364 = vld [vmem:[#allocation2 + $0x4c8] sm:$0xff]
    %v365 = vld [vmem:[#allocation2 + $0x4d0] sm:$0xff]
    %v366 = vld [vmem:[#allocation2 + $0x4d8] sm:$0xff]
    %v367 = vld [vmem:[#allocation2 + $0x4e0] sm:$0xff]
    %v368 = vld [vmem:[#allocation2 + $0x4e8] sm:$0xff]
    %v369 = vld [vmem:[#allocation2 + $0x4f0] sm:$0xff]
    %v370 = vld [vmem:[#allocation2 + $0x4f8] sm:$0xff]
    %v371 = vld [vmem:[#allocation2 + $0x500] sm:$0xff]
    %v372 = vld [vmem:[#allocation2 + $0x508] sm:$0xff]
    %v373 = vld [vmem:[#allocation2 + $0x510] sm:$0xff]
    %v374 = vld [vmem:[#allocation2 + $0x518] sm:$0xff]
    %v375 = vld [vmem:[#allocation2 + $0x520] sm:$0xff]
    %v376 = vld [vmem:[#allocation2 + $0x528] sm:$0xff]
    %v377 = vld [vmem:[#allocation2 + $0x530] sm:$0xff]
    %v378 = vld [vmem:[#allocation2 + $0x538] sm:$0xff]
    %v379 = vld [vmem:[#allocation2 + $0x540] sm:$0xff]
    %v380 = vld [vmem:[#allocation2 + $0x548] sm:$0xff]
    %v381 = vld [vmem:[#allocation2 + $0x550] sm:$0xff]
    %v382 = vld [vmem:[#allocation2 + $0x558] sm:$0xff]
    %v383 = vld [vmem:[#allocation2 + $0x560] sm:$0xff]
    %v384 = vld [vmem:[#allocation2 + $0x568] sm:$0xff]
    %v385 = vld [vmem:[#allocation2 + $0x570] sm:$0xff]
    %v386 = vld [vmem:[#allocation2 + $0x578] sm:$0xff]
    %v387 = vld [vmem:[#allocation2 + $0x580] sm:$0xff]
    %v388 = vld [vmem:[#allocation2 + $0x588] sm:$0xff]
    %v389 = vld [vmem:[#allocation2 + $0x590] sm:$0xff]
    %v390 = vld [vmem:[#allocation2 + $0x598] sm:$0xff]
    %v391 = vld [vmem:[#allocation2 + $0x5a0] sm:$0xff]
    %v392 = vld [vmem:[#allocation2 + $0x5a8] sm:$0xff]
    %v393 = vld [vmem:[#allocation2 + $0x5b0] sm:$0xff]
    %v394 = vld [vmem:[#allocation2 + $0x5b8] sm:$0xff]
    %v395 = vld [vmem:[#allocation2 + $0x5c0] sm:$0xff]
    %v396 = vld [vmem:[#allocation2 + $0x5c8] sm:$0xff]
    %v397 = vld [vmem:[#allocation2 + $0x5d0] sm:$0xff]
    %v398 = vld [vmem:[#allocation2 + $0x5d8] sm:$0xff]
    %v399 = vld [vmem:[#allocation2 + $0x5e0] sm:$0xff]
    %v400 = vld [vmem:[#allocation2 + $0x5e8] sm:$0xff]
    %v401 = vld [vmem:[#allocation2 + $0x5f0] sm:$0xff]
    %v402 = vld [vmem:[#allocation2 + $0x5f8] sm:$0xff]
    %v403 = vld [vmem:[#allocation2 + $0x600] sm:$0xff]
    %v404 = vld [vmem:[#allocation2 + $0x608] sm:$0xff]
    %v405 = vld [vmem:[#allocation2 + $0x610] sm:$0xff]
    %v406 = vld [vmem:[#allocation2 + $0x618] sm:$0xff]
    %v407 = vld [vmem:[#allocation2 + $0x620] sm:$0xff]
    %v408 = vld [vmem:[#allocation2 + $0x628] sm:$0xff]
    %v409 = vld [vmem:[#allocation2 + $0x630] sm:$0xff]
    %v410 = vld [vmem:[#allocation2 + $0x638] sm:$0xff]
    %v411 = vld [vmem:[#allocation2 + $0x640] sm:$0xff]
    %v412 = vld [vmem:[#allocation2 + $0x648] sm:$0xff]
    %v413 = vld [vmem:[#allocation2 + $0x650] sm:$0xff]
    %v414 = vld [vmem:[#allocation2 + $0x658] sm:$0xff]
    %v415 = vld [vmem:[#allocation2 + $0x660] sm:$0xff]
    %v416 = vld [vmem:[#allocation2 + $0x668] sm:$0xff]
    %v417 = vld [vmem:[#allocation2 + $0x670] sm:$0xff]
    %v418 = vld [vmem:[#allocation2 + $0x678] sm:$0xff]
    %v419 = vld [vmem:[#allocation2 + $0x680] sm:$0xff]
    %v420 = vld [vmem:[#allocation2 + $0x688] sm:$0xff]
    %v421 = vld [vmem:[#allocation2 + $0x690] sm:$0xff]
    %v422 = vld [vmem:[#allocation2 + $0x698] sm:$0xff]
    %v423 = vld [vmem:[#allocation2 + $0x6a0] sm:$0xff]
    %v424 = vld [vmem:[#allocation2 + $0x6a8] sm:$0xff]
    %v425 = vld [vmem:[#allocation2 + $0x6b0] sm:$0xff]
    %v426 = vld [vmem:[#allocation2 + $0x6b8] sm:$0xff]
    %v427 = vld [vmem:[#allocation2 + $0x6c0] sm:$0xff]
    %v428 = vld [vmem:[#allocation2 + $0x6c8] sm:$0xff]
    %v429 = vld [vmem:[#allocation2 + $0x6d0] sm:$0xff]
    %v430 = vld [vmem:[#allocation2 + $0x6d8] sm:$0xff]
    %v431 = vld [vmem:[#allocation2 + $0x6e0] sm:$0xff]
    %v432 = vld [vmem:[#allocation2 + $0x6e8] sm:$0xff]
    %v433 = vld [vmem:[#allocation2 + $0x6f0] sm:$0xff]
    %v434 = vld [vmem:[#allocation2 + $0x6f8] sm:$0xff]
    %v435 = vld [vmem:[#allocation2 + $0x700] sm:$0xff]
    %v436 = vld [vmem:[#allocation2 + $0x708] sm:$0xff]
    %v437 = vld [vmem:[#allocation2 + $0x710] sm:$0xff]
    %v438 = vld [vmem:[#allocation2 + $0x718] sm:$0xff]
    %v439 = vld [vmem:[#allocation2 + $0x720] sm:$0xff]
    %v440 = vld [vmem:[#allocation2 + $0x728] sm:$0xff]
    %v441 = vld [vmem:[#allocation2 + $0x730] sm:$0xff]
    %v442 = vld [vmem:[#allocation2 + $0x738] sm:$0xff]
    %v443 = vld [vmem:[#allocation2 + $0x740] sm:$0xff]
    %v444 = vld [vmem:[#allocation2 + $0x748] sm:$0xff]
    %v445 = vld [vmem:[#allocation2 + $0x750] sm:$0xff]
    %v446 = vld [vmem:[#allocation2 + $0x758] sm:$0xff]
    %v447 = vld [vmem:[#allocation2 + $0x760] sm:$0xff]
    %v448 = vld [vmem:[#allocation2 + $0x768] sm:$0xff]
    %v449 = vld [vmem:[#allocation2 + $0x770] sm:$0xff]
    %v450 = vld [vmem:[#allocation2 + $0x778] sm:$0xff]
    %v451 = vld [vmem:[#allocation2 + $0x780] sm:$0xff]
    %v452 = vld [vmem:[#allocation2 + $0x788] sm:$0xff]
    %v453 = vld [vmem:[#allocation2 + $0x790] sm:$0xff]
    %v454 = vld [vmem:[#allocation2 + $0x798] sm:$0xff]
    %v455 = vld [vmem:[#allocation2 + $0x7a0] sm:$0xff]
    %v456 = vld [vmem:[#allocation2 + $0x7a8] sm:$0xff]
    %v457 = vld [vmem:[#allocation2 + $0x7b0] sm:$0xff]
    %v458 = vld [vmem:[#allocation2 + $0x7b8] sm:$0xff]
    %v459 = vld [vmem:[#allocation2 + $0x7c0] sm:$0xff]
    %v460 = vld [vmem:[#allocation2 + $0x7c8] sm:$0xff]
    %v461 = vld [vmem:[#allocation2 + $0x7d0] sm:$0xff]
    %v462 = vld [vmem:[#allocation2 + $0x7d8] sm:$0xff]
    %v463 = vld [vmem:[#allocation2 + $0x7e0] sm:$0xff]
    %v464 = vld [vmem:[#allocation2 + $0x7e8] sm:$0xff]
    %v465 = vld [vmem:[#allocation2 + $0x7f0] sm:$0xff]
    %v466 = vld [vmem:[#allocation2 + $0x7f8] sm:$0xff]
    %v467 = vld [vmem:[#allocation2 + $0x800] sm:$0xff]
    %v468 = vld [vmem:[#allocation2 + $0x808] sm:$0xff]
    %v469 = vld [vmem:[#allocation2 + $0x810] sm:$0xff]
    %v470 = vld [vmem:[#allocation2 + $0x818] sm:$0xff]
    %v471 = vld [vmem:[#allocation2 + $0x820] sm:$0xff]
    %v472 = vld [vmem:[#allocation2 + $0x828] sm:$0xff]
    %v473 = vld [vmem:[#allocation2 + $0x830] sm:$0xff]
    %v474 = vld [vmem:[#allocation2 + $0x838] sm:$0xff]
    %v475 = vld [vmem:[#allocation2 + $0x840] sm:$0xff]
    %v476 = vld [vmem:[#allocation2 + $0x848] sm:$0xff]
    %v477 = vld [vmem:[#allocation2 + $0x850] sm:$0xff]
    %v478 = vld [vmem:[#allocation2 + $0x858] sm:$0xff]
    %v479 = vld [vmem:[#allocation2 + $0x860] sm:$0xff]
    %v480 = vld [vmem:[#allocation2 + $0x868] sm:$0xff]
    %v481 = vld [vmem:[#allocation2 + $0x870] sm:$0xff]
    %v482 = vld [vmem:[#allocation2 + $0x878] sm:$0xff]
    %v483 = vld [vmem:[#allocation2 + $0x880] sm:$0xff]
    %v484 = vld [vmem:[#allocation2 + $0x888] sm:$0xff]
    %v485 = vld [vmem:[#allocation2 + $0x890] sm:$0xff]
    %v486 = vld [vmem:[#allocation2 + $0x898] sm:$0xff]
    %v487 = vld [vmem:[#allocation2 + $0x8a0] sm:$0xff]
    %v488 = vld [vmem:[#allocation2 + $0x8a8] sm:$0xff]
    %v489 = vld [vmem:[#allocation2 + $0x8b0] sm:$0xff]
    %v490 = vld [vmem:[#allocation2 + $0x8b8] sm:$0xff]
    %v491 = vld [vmem:[#allocation2 + $0x8c0] sm:$0xff]
    %v492 = vld [vmem:[#allocation2 + $0x8c8] sm:$0xff]
    %v493 = vld [vmem:[#allocation2 + $0x8d0] sm:$0xff]
    %v494 = vld [vmem:[#allocation2 + $0x8d8] sm:$0xff]
    %v495 = vld [vmem:[#allocation2 + $0x8e0] sm:$0xff]
    %v496 = vld [vmem:[#allocation2 + $0x8e8] sm:$0xff]
    %v497 = vld [vmem:[#allocation2 + $0x8f0] sm:$0xff]
    %v498 = vld [vmem:[#allocation2 + $0x8f8] sm:$0xff]
    %v499 = vld [vmem:[#allocation2 + $0x900] sm:$0xff]
    %v500 = vld [vmem:[#allocation2 + $0x908] sm:$0xff]
    %v501 = vld [vmem:[#allocation2 + $0x910] sm:$0xff]
    %v502 = vld [vmem:[#allocation2 + $0x918] sm:$0xff]
    %v503 = vld [vmem:[#allocation2 + $0x920] sm:$0xff]
    %v504 = vld [vmem:[#allocation2 + $0x928] sm:$0xff]
    %v505 = vld [vmem:[#allocation2 + $0x930] sm:$0xff]
    %v506 = vld [vmem:[#allocation2 + $0x938] sm:$0xff]
    %v507 = vld [vmem:[#allocation2 + $0x940] sm:$0xff]
    %v508 = vld [vmem:[#allocation2 + $0x948] sm:$0xff]
    %v509 = vld [vmem:[#allocation2 + $0x950] sm:$0xff]
    %v510 = vld [vmem:[#allocation2 + $0x958] sm:$0xff]
    %v511 = vld [vmem:[#allocation2 + $0x960] sm:$0xff]
    %v512 = vld [vmem:[#allocation2 + $0x968] sm:$0xff]
    %v513 = vld [vmem:[#allocation2 + $0x970] sm:$0xff]
    %v514 = vld [vmem:[#allocation2 + $0x978] sm:$0xff]
    %v515 = vld [vmem:[#allocation2 + $0x980] sm:$0xff]
    %v516 = vld [vmem:[#allocation2 + $0x988] sm:$0xff]
    %v517 = vld [vmem:[#allocation2 + $0x990] sm:$0xff]
    %v518 = vld [vmem:[#allocation2 + $0x998] sm:$0xff]
    %v519 = vld [vmem:[#allocation2 + $0x9a0] sm:$0xff]
    %v520 = vld [vmem:[#allocation2 + $0x9a8] sm:$0xff]
    %v521 = vld [vmem:[#allocation2 + $0x9b0] sm:$0xff]
    %v522 = vld [vmem:[#allocation2 + $0x9b8] sm:$0xff]
    %v523 = vld [vmem:[#allocation2 + $0x9c0] sm:$0xff]
    %v524 = vld [vmem:[#allocation2 + $0x9c8] sm:$0xff]
    %v525 = vld [vmem:[#allocation2 + $0x9d0] sm:$0xff]
    %v526 = vld [vmem:[#allocation2 + $0x9d8] sm:$0xff]
    %v527 = vld [vmem:[#allocation2 + $0x9e0] sm:$0xff]
    %v528 = vld [vmem:[#allocation2 + $0x9e8] sm:$0xff]
    %v529 = vld [vmem:[#allocation2 + $0x9f0] sm:$0xff]
    %v530 = vld [vmem:[#allocation2 + $0x9f8] sm:$0xff]
    %v531 = vld [vmem:[#allocation2 + $0xa00] sm:$0xff]
    %v532 = vld [vmem:[#allocation2 + $0xa08] sm:$0xff]
    %v533 = vld [vmem:[#allocation2 + $0xa10] sm:$0xff]
    %v534 = vld [vmem:[#allocation2 + $0xa18] sm:$0xff]
    %v535 = vld [vmem:[#allocation2 + $0xa20] sm:$0xff]
    %v536 = vld [vmem:[#allocation2 + $0xa28] sm:$0xff]
    %v537 = vld [vmem:[#allocation2 + $0xa30] sm:$0xff]
    %v538 = vld [vmem:[#allocation2 + $0xa38] sm:$0xff]
    %v539 = vld [vmem:[#allocation2 + $0xa40] sm:$0xff]
    %v540 = vld [vmem:[#allocation2 + $0xa48] sm:$0xff]
    %v541 = vld [vmem:[#allocation2 + $0xa50] sm:$0xff]
    %v542 = vld [vmem:[#allocation2 + $0xa58] sm:$0xff]
    %v543 = vld [vmem:[#allocation2 + $0xa60] sm:$0xff]
    %v544 = vld [vmem:[#allocation2 + $0xa68] sm:$0xff]
    %v545 = vld [vmem:[#allocation2 + $0xa70] sm:$0xff]
    %v546 = vld [vmem:[#allocation2 + $0xa78] sm:$0xff]
    %v547 = vld [vmem:[#allocation2 + $0xa80] sm:$0xff]
    %v548 = vld [vmem:[#allocation2 + $0xa88] sm:$0xff]
    %v549 = vld [vmem:[#allocation2 + $0xa90] sm:$0xff]
    %v550 = vld [vmem:[#allocation2 + $0xa98] sm:$0xff]
    %v551 = vld [vmem:[#allocation2 + $0xaa0] sm:$0xff]
    %v552 = vld [vmem:[#allocation2 + $0xaa8] sm:$0xff]
    %v553 = vld [vmem:[#allocation2 + $0xab0] sm:$0xff]
    %v554 = vld [vmem:[#allocation2 + $0xab8] sm:$0xff]
    %v555 = vld [vmem:[#allocation2 + $0xac0] sm:$0xff]
    %v556 = vld [vmem:[#allocation2 + $0xac8] sm:$0xff]
    %v557 = vld [vmem:[#allocation2 + $0xad0] sm:$0xff]
    %v558 = vld [vmem:[#allocation2 + $0xad8] sm:$0xff]
    %v559 = vld [vmem:[#allocation2 + $0xae0] sm:$0xff]
    %v560 = vld [vmem:[#allocation2 + $0xae8] sm:$0xff]
    %v561 = vld [vmem:[#allocation2 + $0xaf0] sm:$0xff]
    %v562 = vld [vmem:[#allocation2 + $0xaf8] sm:$0xff]
    %v563 = vld [vmem:[#allocation2 + $0xb00] sm:$0xff]
    %v564 = vld [vmem:[#allocation2 + $0xb08] sm:$0xff]
    %v565 = vld [vmem:[#allocation2 + $0xb10] sm:$0xff]
    %v566 = vld [vmem:[#allocation2 + $0xb18] sm:$0xff]
    %v567 = vld [vmem:[#allocation2 + $0xb20] sm:$0xff]
    %v568 = vld [vmem:[#allocation2 + $0xb28] sm:$0xff]
    %v569 = vld [vmem:[#allocation2 + $0xb30] sm:$0xff]
    %v570 = vld [vmem:[#allocation2 + $0xb38] sm:$0xff]
    %v571 = vld [vmem:[#allocation2 + $0xb40] sm:$0xff]
    %v572 = vld [vmem:[#allocation2 + $0xb48] sm:$0xff]
    %v573 = vld [vmem:[#allocation2 + $0xb50] sm:$0xff]
    %v574 = vld [vmem:[#allocation2 + $0xb58] sm:$0xff]
    %v575 = vld [vmem:[#allocation2 + $0xb60] sm:$0xff]
    %v576 = vld [vmem:[#allocation2 + $0xb68] sm:$0xff]
    %v577 = vld [vmem:[#allocation2 + $0xb70] sm:$0xff]
    %v578 = vld [vmem:[#allocation2 + $0xb78] sm:$0xff]
    %v579 = vld [vmem:[#allocation2 + $0xb80] sm:$0xff]
    %v580 = vld [vmem:[#allocation2 + $0xb88] sm:$0xff]
    %v581 = vld [vmem:[#allocation2 + $0xb90] sm:$0xff]
    %v582 = vld [vmem:[#allocation2 + $0xb98] sm:$0xff]
    %v583 = vld [vmem:[#allocation2 + $0xba0] sm:$0xff]
    %v584 = vld [vmem:[#allocation2 + $0xba8] sm:$0xff]
    %v585 = vld [vmem:[#allocation2 + $0xbb0] sm:$0xff]
    %v586 = vld [vmem:[#allocation2 + $0xbb8] sm:$0xff]
    %v587 = vld [vmem:[#allocation2 + $0xbc0] sm:$0xff]
    %v588 = vld [vmem:[#allocation2 + $0xbc8] sm:$0xff]
    %v589 = vld [vmem:[#allocation2 + $0xbd0] sm:$0xff]
    %v590 = vld [vmem:[#allocation2 + $0xbd8] sm:$0xff]
    %v591 = vld [vmem:[#allocation2 + $0xbe0] sm:$0xff]
    %v592 = vld [vmem:[#allocation2 + $0xbe8] sm:$0xff]
    %v593 = vld [vmem:[#allocation2 + $0xbf0] sm:$0xff]
    %v594 = vld [vmem:[#allocation2 + $0xbf8] sm:$0xff]
    %v595 = vld [vmem:[#allocation5] sm:$0x3]
    %v597 = vperm.slane %v595, 0
    %v598 = vperm.slane %v595, 1
    %v985 = vunpack.c.l.b16 %v211
    %v986 = vunpack.c.h.b16 %v211
    %v987 = vunpack.c.l.b16 %v212
    %v988 = vunpack.c.h.b16 %v212
    %v989 = vunpack.c.l.b16 %v213
    %v990 = vunpack.c.h.b16 %v213
    %v991 = vunpack.c.l.b16 %v214
    %v992 = vunpack.c.h.b16 %v214
    %v993 = vunpack.c.l.b16 %v215
    %v994 = vunpack.c.h.b16 %v215
    %v995 = vunpack.c.l.b16 %v216
    %v996 = vunpack.c.h.b16 %v216
    %v997 = vunpack.c.l.b16 %v217
    %v998 = vunpack.c.h.b16 %v217
    %v999 = vunpack.c.l.b16 %v218
    %v1000 = vunpack.c.h.b16 %v218
    %v1001 = vunpack.c.l.b16 %v219
    %v1002 = vunpack.c.h.b16 %v219
    %v1003 = vunpack.c.l.b16 %v220
    %v1004 = vunpack.c.h.b16 %v220
    %v1005 = vunpack.c.l.b16 %v221
    %v1006 = vunpack.c.h.b16 %v221
    %v1007 = vunpack.c.l.b16 %v222
    %v1008 = vunpack.c.h.b16 %v222
    %v1009 = vunpack.c.l.b16 %v223
    %v1010 = vunpack.c.h.b16 %v223
    %v1011 = vunpack.c.l.b16 %v224
    %v1012 = vunpack.c.h.b16 %v224
    %v1013 = vunpack.c.l.b16 %v225
    %v1014 = vunpack.c.h.b16 %v225
    %v1015 = vunpack.c.l.b16 %v226
    %v1016 = vunpack.c.h.b16 %v226
    %v1017 = vunpack.c.l.b16 %v227
    %v1018 = vunpack.c.h.b16 %v227
    %v1019 = vunpack.c.l.b16 %v228
    %v1020 = vunpack.c.h.b16 %v228
    %v1021 = vunpack.c.l.b16 %v229
    %v1022 = vunpack.c.h.b16 %v229
    %v1023 = vunpack.c.l.b16 %v230
    %v1024 = vunpack.c.h.b16 %v230
    %v1025 = vunpack.c.l.b16 %v231
    %v1026 = vunpack.c.h.b16 %v231
    %v1027 = vunpack.c.l.b16 %v232
    %v1028 = vunpack.c.h.b16 %v232
    %v1029 = vunpack.c.l.b16 %v233
    %v1030 = vunpack.c.h.b16 %v233
    %v1031 = vunpack.c.l.b16 %v234
    %v1032 = vunpack.c.h.b16 %v234
    %v1033 = vunpack.c.l.b16 %v235
    %v1034 = vunpack.c.h.b16 %v235
    %v1035 = vunpack.c.l.b16 %v236
    %v1036 = vunpack.c.h.b16 %v236
    %v1037 = vunpack.c.l.b16 %v237
    %v1038 = vunpack.c.h.b16 %v237
    %v1039 = vunpack.c.l.b16 %v238
    %v1040 = vunpack.c.h.b16 %v238
    %v1041 = vunpack.c.l.b16 %v239
    %v1042 = vunpack.c.h.b16 %v239
    %v1043 = vunpack.c.l.b16 %v240
    %v1044 = vunpack.c.h.b16 %v240
    %v1045 = vunpack.c.l.b16 %v241
    %v1046 = vunpack.c.h.b16 %v241
    %v1047 = vunpack.c.l.b16 %v242
    %v1048 = vunpack.c.h.b16 %v242
    %v1049 = vunpack.c.l.b16 %v243
    %v1050 = vunpack.c.h.b16 %v243
    %v1051 = vunpack.c.l.b16 %v244
    %v1052 = vunpack.c.h.b16 %v244
    %v1053 = vunpack.c.l.b16 %v245
    %v1054 = vunpack.c.h.b16 %v245
    %v1055 = vunpack.c.l.b16 %v246
    %v1056 = vunpack.c.h.b16 %v246
    %v1057 = vunpack.c.l.b16 %v247
    %v1058 = vunpack.c.h.b16 %v247
    %v1059 = vunpack.c.l.b16 %v248
    %v1060 = vunpack.c.h.b16 %v248
    %v1061 = vunpack.c.l.b16 %v249
    %v1062 = vunpack.c.h.b16 %v249
    %v1063 = vunpack.c.l.b16 %v250
    %v1064 = vunpack.c.h.b16 %v250
    %v1065 = vunpack.c.l.b16 %v251
    %v1066 = vunpack.c.h.b16 %v251
    %v1067 = vunpack.c.l.b16 %v252
    %v1068 = vunpack.c.h.b16 %v252
    %v1069 = vunpack.c.l.b16 %v253
    %v1070 = vunpack.c.h.b16 %v253
    %v1071 = vunpack.c.l.b16 %v254
    %v1072 = vunpack.c.h.b16 %v254
    %v1073 = vunpack.c.l.b16 %v255
    %v1074 = vunpack.c.h.b16 %v255
    %v1075 = vunpack.c.l.b16 %v256
    %v1076 = vunpack.c.h.b16 %v256
    %v1077 = vunpack.c.l.b16 %v257
    %v1078 = vunpack.c.h.b16 %v257
    %v1079 = vunpack.c.l.b16 %v258
    %v1080 = vunpack.c.h.b16 %v258
    %v1081 = vunpack.c.l.b16 %v259
    %v1082 = vunpack.c.h.b16 %v259
    %v1083 = vunpack.c.l.b16 %v260
    %v1084 = vunpack.c.h.b16 %v260
    %v1085 = vunpack.c.l.b16 %v261
    %v1086 = vunpack.c.h.b16 %v261
    %v1087 = vunpack.c.l.b16 %v262
    %v1088 = vunpack.c.h.b16 %v262
    %v1089 = vunpack.c.l.b16 %v263
    %v1090 = vunpack.c.h.b16 %v263
    %v1091 = vunpack.c.l.b16 %v264
    %v1092 = vunpack.c.h.b16 %v264
    %v1093 = vunpack.c.l.b16 %v265
    %v1094 = vunpack.c.h.b16 %v265
    %v1095 = vunpack.c.l.b16 %v266
    %v1096 = vunpack.c.h.b16 %v266
    %v1097 = vunpack.c.l.b16 %v267
    %v1098 = vunpack.c.h.b16 %v267
    %v1099 = vunpack.c.l.b16 %v268
    %v1100 = vunpack.c.h.b16 %v268
    %v1101 = vunpack.c.l.b16 %v269
    %v1102 = vunpack.c.h.b16 %v269
    %v1103 = vunpack.c.l.b16 %v270
    %v1104 = vunpack.c.h.b16 %v270
    %v1105 = vunpack.c.l.b16 %v271
    %v1106 = vunpack.c.h.b16 %v271
    %v1107 = vunpack.c.l.b16 %v272
    %v1108 = vunpack.c.h.b16 %v272
    %v1109 = vunpack.c.l.b16 %v273
    %v1110 = vunpack.c.h.b16 %v273
    %v1111 = vunpack.c.l.b16 %v274
    %v1112 = vunpack.c.h.b16 %v274
    %v1113 = vunpack.c.l.b16 %v275
    %v1114 = vunpack.c.h.b16 %v275
    %v1115 = vunpack.c.l.b16 %v276
    %v1116 = vunpack.c.h.b16 %v276
    %v1117 = vunpack.c.l.b16 %v277
    %v1118 = vunpack.c.h.b16 %v277
    %v1119 = vunpack.c.l.b16 %v278
    %v1120 = vunpack.c.h.b16 %v278
    %v1121 = vunpack.c.l.b16 %v279
    %v1122 = vunpack.c.h.b16 %v279
    %v1123 = vunpack.c.l.b16 %v280
    %v1124 = vunpack.c.h.b16 %v280
    %v1125 = vunpack.c.l.b16 %v281
    %v1126 = vunpack.c.h.b16 %v281
    %v1127 = vunpack.c.l.b16 %v282
    %v1128 = vunpack.c.h.b16 %v282
    %v1129 = vunpack.c.l.b16 %v283
    %v1130 = vunpack.c.h.b16 %v283
    %v1131 = vunpack.c.l.b16 %v284
    %v1132 = vunpack.c.h.b16 %v284
    %v1133 = vunpack.c.l.b16 %v285
    %v1134 = vunpack.c.h.b16 %v285
    %v1135 = vunpack.c.l.b16 %v286
    %v1136 = vunpack.c.h.b16 %v286
    %v1137 = vunpack.c.l.b16 %v287
    %v1138 = vunpack.c.h.b16 %v287
    %v1139 = vunpack.c.l.b16 %v288
    %v1140 = vunpack.c.h.b16 %v288
    %v1141 = vunpack.c.l.b16 %v289
    %v1142 = vunpack.c.h.b16 %v289
    %v1143 = vunpack.c.l.b16 %v290
    %v1144 = vunpack.c.h.b16 %v290
    %v1145 = vunpack.c.l.b16 %v291
    %v1146 = vunpack.c.h.b16 %v291
    %v1147 = vunpack.c.l.b16 %v292
    %v1148 = vunpack.c.h.b16 %v292
    %v1149 = vunpack.c.l.b16 %v293
    %v1150 = vunpack.c.h.b16 %v293
    %v1151 = vunpack.c.l.b16 %v294
    %v1152 = vunpack.c.h.b16 %v294
    %v1153 = vunpack.c.l.b16 %v295
    %v1154 = vunpack.c.h.b16 %v295
    %v1155 = vunpack.c.l.b16 %v296
    %v1156 = vunpack.c.h.b16 %v296
    %v1157 = vunpack.c.l.b16 %v297
    %v1158 = vunpack.c.h.b16 %v297
    %v1159 = vunpack.c.l.b16 %v298
    %v1160 = vunpack.c.h.b16 %v298
    %v1161 = vunpack.c.l.b16 %v299
    %v1162 = vunpack.c.h.b16 %v299
    %v1163 = vunpack.c.l.b16 %v300
    %v1164 = vunpack.c.h.b16 %v300
    %v1165 = vunpack.c.l.b16 %v301
    %v1166 = vunpack.c.h.b16 %v301
    %v1167 = vunpack.c.l.b16 %v302
    %v1168 = vunpack.c.h.b16 %v302
    %v1169 = vunpack.c.l.b16 %v303
    %v1170 = vunpack.c.h.b16 %v303
    %v1171 = vunpack.c.l.b16 %v304
    %v1172 = vunpack.c.h.b16 %v304
    %v1173 = vunpack.c.l.b16 %v305
    %v1174 = vunpack.c.h.b16 %v305
    %v1175 = vunpack.c.l.b16 %v306
    %v1176 = vunpack.c.h.b16 %v306
    %v1177 = vunpack.c.l.b16 %v307
    %v1178 = vunpack.c.h.b16 %v307
    %v1179 = vunpack.c.l.b16 %v308
    %v1180 = vunpack.c.h.b16 %v308
    %v1181 = vunpack.c.l.b16 %v309
    %v1182 = vunpack.c.h.b16 %v309
    %v1183 = vunpack.c.l.b16 %v310
    %v1184 = vunpack.c.h.b16 %v310
    %v1185 = vunpack.c.l.b16 %v311
    %v1186 = vunpack.c.h.b16 %v311
    %v1187 = vunpack.c.l.b16 %v312
    %v1188 = vunpack.c.h.b16 %v312
    %v1189 = vunpack.c.l.b16 %v313
    %v1190 = vunpack.c.h.b16 %v313
    %v1191 = vunpack.c.l.b16 %v314
    %v1192 = vunpack.c.h.b16 %v314
    %v1193 = vunpack.c.l.b16 %v315
    %v1194 = vunpack.c.h.b16 %v315
    %v1195 = vunpack.c.l.b16 %v316
    %v1196 = vunpack.c.h.b16 %v316
    %v1197 = vunpack.c.l.b16 %v317
    %v1198 = vunpack.c.h.b16 %v317
    %v1199 = vunpack.c.l.b16 %v318
    %v1200 = vunpack.c.h.b16 %v318
    %v1201 = vunpack.c.l.b16 %v319
    %v1202 = vunpack.c.h.b16 %v319
    %v1203 = vunpack.c.l.b16 %v320
    %v1204 = vunpack.c.h.b16 %v320
    %v1205 = vunpack.c.l.b16 %v321
    %v1206 = vunpack.c.h.b16 %v321
    %v1207 = vunpack.c.l.b16 %v322
    %v1208 = vunpack.c.h.b16 %v322
    %v1209 = vunpack.c.l.b16 %v323
    %v1210 = vunpack.c.h.b16 %v323
    %v1211 = vunpack.c.l.b16 %v324
    %v1212 = vunpack.c.h.b16 %v324
    %v1213 = vunpack.c.l.b16 %v325
    %v1214 = vunpack.c.h.b16 %v325
    %v1215 = vunpack.c.l.b16 %v326
    %v1216 = vunpack.c.h.b16 %v326
    %v1217 = vunpack.c.l.b16 %v327
    %v1218 = vunpack.c.h.b16 %v327
    %v1219 = vunpack.c.l.b16 %v328
    %v1220 = vunpack.c.h.b16 %v328
    %v1221 = vunpack.c.l.b16 %v329
    %v1222 = vunpack.c.h.b16 %v329
    %v1223 = vunpack.c.l.b16 %v330
    %v1224 = vunpack.c.h.b16 %v330
    %v1225 = vunpack.c.l.b16 %v331
    %v1226 = vunpack.c.h.b16 %v331
    %v1227 = vunpack.c.l.b16 %v332
    %v1228 = vunpack.c.h.b16 %v332
    %v1229 = vunpack.c.l.b16 %v333
    %v1230 = vunpack.c.h.b16 %v333
    %v1231 = vunpack.c.l.b16 %v334
    %v1232 = vunpack.c.h.b16 %v334
    %v1233 = vunpack.c.l.b16 %v335
    %v1234 = vunpack.c.h.b16 %v335
    %v1235 = vunpack.c.l.b16 %v336
    %v1236 = vunpack.c.h.b16 %v336
    %v1237 = vunpack.c.l.b16 %v337
    %v1238 = vunpack.c.h.b16 %v337
    %v1239 = vunpack.c.l.b16 %v338
    %v1240 = vunpack.c.h.b16 %v338
    %v1241 = vunpack.c.l.b16 %v339
    %v1242 = vunpack.c.h.b16 %v339
    %v1243 = vunpack.c.l.b16 %v340
    %v1244 = vunpack.c.h.b16 %v340
    %v1245 = vunpack.c.l.b16 %v341
    %v1246 = vunpack.c.h.b16 %v341
    %v1247 = vunpack.c.l.b16 %v342
    %v1248 = vunpack.c.h.b16 %v342
    %v1249 = vunpack.c.l.b16 %v343
    %v1250 = vunpack.c.h.b16 %v343
    %v1251 = vunpack.c.l.b16 %v344
    %v1252 = vunpack.c.h.b16 %v344
    %v1253 = vunpack.c.l.b16 %v345
    %v1254 = vunpack.c.h.b16 %v345
    %v1255 = vunpack.c.l.b16 %v346
    %v1256 = vunpack.c.h.b16 %v346
    %v1257 = vunpack.c.l.b16 %v347
    %v1258 = vunpack.c.h.b16 %v347
    %v1259 = vunpack.c.l.b16 %v348
    %v1260 = vunpack.c.h.b16 %v348
    %v1261 = vunpack.c.l.b16 %v349
    %v1262 = vunpack.c.h.b16 %v349
    %v1263 = vunpack.c.l.b16 %v350
    %v1264 = vunpack.c.h.b16 %v350
    %v1265 = vunpack.c.l.b16 %v351
    %v1266 = vunpack.c.h.b16 %v351
    %v1267 = vunpack.c.l.b16 %v352
    %v1268 = vunpack.c.h.b16 %v352
    %v1269 = vunpack.c.l.b16 %v353
    %v1270 = vunpack.c.h.b16 %v353
    %v1271 = vunpack.c.l.b16 %v354
    %v1272 = vunpack.c.h.b16 %v354
    %v1273 = vunpack.c.l.b16 %v355
    %v1274 = vunpack.c.h.b16 %v355
    %v1275 = vunpack.c.l.b16 %v356
    %v1276 = vunpack.c.h.b16 %v356
    %v1277 = vunpack.c.l.b16 %v357
    %v1278 = vunpack.c.h.b16 %v357
    %v1279 = vunpack.c.l.b16 %v358
    %v1280 = vunpack.c.h.b16 %v358
    %v1281 = vunpack.c.l.b16 %v359
    %v1282 = vunpack.c.h.b16 %v359
    %v1283 = vunpack.c.l.b16 %v360
    %v1284 = vunpack.c.h.b16 %v360
    %v1285 = vunpack.c.l.b16 %v361
    %v1286 = vunpack.c.h.b16 %v361
    %v1287 = vunpack.c.l.b16 %v362
    %v1288 = vunpack.c.h.b16 %v362
    %v1289 = vunpack.c.l.b16 %v363
    %v1290 = vunpack.c.h.b16 %v363
    %v1291 = vunpack.c.l.b16 %v364
    %v1292 = vunpack.c.h.b16 %v364
    %v1293 = vunpack.c.l.b16 %v365
    %v1294 = vunpack.c.h.b16 %v365
    %v1295 = vunpack.c.l.b16 %v366
    %v1296 = vunpack.c.h.b16 %v366
    %v1297 = vunpack.c.l.b16 %v367
    %v1298 = vunpack.c.h.b16 %v367
    %v1299 = vunpack.c.l.b16 %v368
    %v1300 = vunpack.c.h.b16 %v368
    %v1301 = vunpack.c.l.b16 %v369
    %v1302 = vunpack.c.h.b16 %v369
    %v1303 = vunpack.c.l.b16 %v370
    %v1304 = vunpack.c.h.b16 %v370
    %v1305 = vunpack.c.l.b16 %v371
    %v1306 = vunpack.c.h.b16 %v371
    %v1307 = vunpack.c.l.b16 %v372
    %v1308 = vunpack.c.h.b16 %v372
    %v1309 = vunpack.c.l.b16 %v373
    %v1310 = vunpack.c.h.b16 %v373
    %v1311 = vunpack.c.l.b16 %v374
    %v1312 = vunpack.c.h.b16 %v374
    %v1313 = vunpack.c.l.b16 %v375
    %v1314 = vunpack.c.h.b16 %v375
    %v1315 = vunpack.c.l.b16 %v376
    %v1316 = vunpack.c.h.b16 %v376
    %v1317 = vunpack.c.l.b16 %v377
    %v1318 = vunpack.c.h.b16 %v377
    %v1319 = vunpack.c.l.b16 %v378
    %v1320 = vunpack.c.h.b16 %v378
    %v1321 = vunpack.c.l.b16 %v379
    %v1322 = vunpack.c.h.b16 %v379
    %v1323 = vunpack.c.l.b16 %v380
    %v1324 = vunpack.c.h.b16 %v380
    %v1325 = vunpack.c.l.b16 %v381
    %v1326 = vunpack.c.h.b16 %v381
    %v1327 = vunpack.c.l.b16 %v382
    %v1328 = vunpack.c.h.b16 %v382
    %v1329 = vunpack.c.l.b16 %v383
    %v1330 = vunpack.c.h.b16 %v383
    %v1331 = vunpack.c.l.b16 %v384
    %v1332 = vunpack.c.h.b16 %v384
    %v1333 = vunpack.c.l.b16 %v385
    %v1334 = vunpack.c.h.b16 %v385
    %v1335 = vunpack.c.l.b16 %v386
    %v1336 = vunpack.c.h.b16 %v386
    %v1337 = vunpack.c.l.b16 %v387
    %v1338 = vunpack.c.h.b16 %v387
    %v1339 = vunpack.c.l.b16 %v388
    %v1340 = vunpack.c.h.b16 %v388
    %v1341 = vunpack.c.l.b16 %v389
    %v1342 = vunpack.c.h.b16 %v389
    %v1343 = vunpack.c.l.b16 %v390
    %v1344 = vunpack.c.h.b16 %v390
    %v1345 = vunpack.c.l.b16 %v391
    %v1346 = vunpack.c.h.b16 %v391
    %v1347 = vunpack.c.l.b16 %v392
    %v1348 = vunpack.c.h.b16 %v392
    %v1349 = vunpack.c.l.b16 %v393
    %v1350 = vunpack.c.h.b16 %v393
    %v1351 = vunpack.c.l.b16 %v394
    %v1352 = vunpack.c.h.b16 %v394
    %v1353 = vunpack.c.l.b16 %v395
    %v1354 = vunpack.c.h.b16 %v395
    %v1355 = vunpack.c.l.b16 %v396
    %v1356 = vunpack.c.h.b16 %v396
    %v1357 = vunpack.c.l.b16 %v397
    %v1358 = vunpack.c.h.b16 %v397
    %v1359 = vunpack.c.l.b16 %v398
    %v1360 = vunpack.c.h.b16 %v398
    %v1361 = vunpack.c.l.b16 %v399
    %v1362 = vunpack.c.h.b16 %v399
    %v1363 = vunpack.c.l.b16 %v400
    %v1364 = vunpack.c.h.b16 %v400
    %v1365 = vunpack.c.l.b16 %v401
    %v1366 = vunpack.c.h.b16 %v401
    %v1367 = vunpack.c.l.b16 %v402
    %v1368 = vunpack.c.h.b16 %v402
    %v1369 = vunpack.c.l.b16 %v403
    %v1370 = vunpack.c.h.b16 %v403
    %v1371 = vunpack.c.l.b16 %v404
    %v1372 = vunpack.c.h.b16 %v404
    %v1373 = vunpack.c.l.b16 %v405
    %v1374 = vunpack.c.h.b16 %v405
    %v1375 = vunpack.c.l.b16 %v406
    %v1376 = vunpack.c.h.b16 %v406
    %v1377 = vunpack.c.l.b16 %v407
    %v1378 = vunpack.c.h.b16 %v407
    %v1379 = vunpack.c.l.b16 %v408
    %v1380 = vunpack.c.h.b16 %v408
    %v1381 = vunpack.c.l.b16 %v409
    %v1382 = vunpack.c.h.b16 %v409
    %v1383 = vunpack.c.l.b16 %v410
    %v1384 = vunpack.c.h.b16 %v410
    %v1385 = vunpack.c.l.b16 %v411
    %v1386 = vunpack.c.h.b16 %v411
    %v1387 = vunpack.c.l.b16 %v412
    %v1388 = vunpack.c.h.b16 %v412
    %v1389 = vunpack.c.l.b16 %v413
    %v1390 = vunpack.c.h.b16 %v413
    %v1391 = vunpack.c.l.b16 %v414
    %v1392 = vunpack.c.h.b16 %v414
    %v1393 = vunpack.c.l.b16 %v415
    %v1394 = vunpack.c.h.b16 %v415
    %v1395 = vunpack.c.l.b16 %v416
    %v1396 = vunpack.c.h.b16 %v416
    %v1397 = vunpack.c.l.b16 %v417
    %v1398 = vunpack.c.h.b16 %v417
    %v1399 = vunpack.c.l.b16 %v418
    %v1400 = vunpack.c.h.b16 %v418
    %v1401 = vunpack.c.l.b16 %v419
    %v1402 = vunpack.c.h.b16 %v419
    %v1403 = vunpack.c.l.b16 %v420
    %v1404 = vunpack.c.h.b16 %v420
    %v1405 = vunpack.c.l.b16 %v421
    %v1406 = vunpack.c.h.b16 %v421
    %v1407 = vunpack.c.l.b16 %v422
    %v1408 = vunpack.c.h.b16 %v422
    %v1409 = vunpack.c.l.b16 %v423
    %v1410 = vunpack.c.h.b16 %v423
    %v1411 = vunpack.c.l.b16 %v424
    %v1412 = vunpack.c.h.b16 %v424
    %v1413 = vunpack.c.l.b16 %v425
    %v1414 = vunpack.c.h.b16 %v425
    %v1415 = vunpack.c.l.b16 %v426
    %v1416 = vunpack.c.h.b16 %v426
    %v1417 = vunpack.c.l.b16 %v427
    %v1418 = vunpack.c.h.b16 %v427
    %v1419 = vunpack.c.l.b16 %v428
    %v1420 = vunpack.c.h.b16 %v428
    %v1421 = vunpack.c.l.b16 %v429
    %v1422 = vunpack.c.h.b16 %v429
    %v1423 = vunpack.c.l.b16 %v430
    %v1424 = vunpack.c.h.b16 %v430
    %v1425 = vunpack.c.l.b16 %v431
    %v1426 = vunpack.c.h.b16 %v431
    %v1427 = vunpack.c.l.b16 %v432
    %v1428 = vunpack.c.h.b16 %v432
    %v1429 = vunpack.c.l.b16 %v433
    %v1430 = vunpack.c.h.b16 %v433
    %v1431 = vunpack.c.l.b16 %v434
    %v1432 = vunpack.c.h.b16 %v434
    %v1433 = vunpack.c.l.b16 %v435
    %v1434 = vunpack.c.h.b16 %v435
    %v1435 = vunpack.c.l.b16 %v436
    %v1436 = vunpack.c.h.b16 %v436
    %v1437 = vunpack.c.l.b16 %v437
    %v1438 = vunpack.c.h.b16 %v437
    %v1439 = vunpack.c.l.b16 %v438
    %v1440 = vunpack.c.h.b16 %v438
    %v1441 = vunpack.c.l.b16 %v439
    %v1442 = vunpack.c.h.b16 %v439
    %v1443 = vunpack.c.l.b16 %v440
    %v1444 = vunpack.c.h.b16 %v440
    %v1445 = vunpack.c.l.b16 %v441
    %v1446 = vunpack.c.h.b16 %v441
    %v1447 = vunpack.c.l.b16 %v442
    %v1448 = vunpack.c.h.b16 %v442
    %v1449 = vunpack.c.l.b16 %v443
    %v1450 = vunpack.c.h.b16 %v443
    %v1451 = vunpack.c.l.b16 %v444
    %v1452 = vunpack.c.h.b16 %v444
    %v1453 = vunpack.c.l.b16 %v445
    %v1454 = vunpack.c.h.b16 %v445
    %v1455 = vunpack.c.l.b16 %v446
    %v1456 = vunpack.c.h.b16 %v446
    %v1457 = vunpack.c.l.b16 %v447
    %v1458 = vunpack.c.h.b16 %v447
    %v1459 = vunpack.c.l.b16 %v448
    %v1460 = vunpack.c.h.b16 %v448
    %v1461 = vunpack.c.l.b16 %v449
    %v1462 = vunpack.c.h.b16 %v449
    %v1463 = vunpack.c.l.b16 %v450
    %v1464 = vunpack.c.h.b16 %v450
    %v1465 = vunpack.c.l.b16 %v451
    %v1466 = vunpack.c.h.b16 %v451
    %v1467 = vunpack.c.l.b16 %v452
    %v1468 = vunpack.c.h.b16 %v452
    %v1469 = vunpack.c.l.b16 %v453
    %v1470 = vunpack.c.h.b16 %v453
    %v1471 = vunpack.c.l.b16 %v454
    %v1472 = vunpack.c.h.b16 %v454
    %v1473 = vunpack.c.l.b16 %v455
    %v1474 = vunpack.c.h.b16 %v455
    %v1475 = vunpack.c.l.b16 %v456
    %v1476 = vunpack.c.h.b16 %v456
    %v1477 = vunpack.c.l.b16 %v457
    %v1478 = vunpack.c.h.b16 %v457
    %v1479 = vunpack.c.l.b16 %v458
    %v1480 = vunpack.c.h.b16 %v458
    %v1481 = vunpack.c.l.b16 %v459
    %v1482 = vunpack.c.h.b16 %v459
    %v1483 = vunpack.c.l.b16 %v460
    %v1484 = vunpack.c.h.b16 %v460
    %v1485 = vunpack.c.l.b16 %v461
    %v1486 = vunpack.c.h.b16 %v461
    %v1487 = vunpack.c.l.b16 %v462
    %v1488 = vunpack.c.h.b16 %v462
    %v1489 = vunpack.c.l.b16 %v463
    %v1490 = vunpack.c.h.b16 %v463
    %v1491 = vunpack.c.l.b16 %v464
    %v1492 = vunpack.c.h.b16 %v464
    %v1493 = vunpack.c.l.b16 %v465
    %v1494 = vunpack.c.h.b16 %v465
    %v1495 = vunpack.c.l.b16 %v466
    %v1496 = vunpack.c.h.b16 %v466
    %v1497 = vunpack.c.l.b16 %v467
    %v1498 = vunpack.c.h.b16 %v467
    %v1499 = vunpack.c.l.b16 %v468
    %v1500 = vunpack.c.h.b16 %v468
    %v1501 = vunpack.c.l.b16 %v469
    %v1502 = vunpack.c.h.b16 %v469
    %v1503 = vunpack.c.l.b16 %v470
    %v1504 = vunpack.c.h.b16 %v470
    %v1505 = vunpack.c.l.b16 %v471
    %v1506 = vunpack.c.h.b16 %v471
    %v1507 = vunpack.c.l.b16 %v472
    %v1508 = vunpack.c.h.b16 %v472
    %v1509 = vunpack.c.l.b16 %v473
    %v1510 = vunpack.c.h.b16 %v473
    %v1511 = vunpack.c.l.b16 %v474
    %v1512 = vunpack.c.h.b16 %v474
    %v1513 = vunpack.c.l.b16 %v475
    %v1514 = vunpack.c.h.b16 %v475
    %v1515 = vunpack.c.l.b16 %v476
    %v1516 = vunpack.c.h.b16 %v476
    %v1517 = vunpack.c.l.b16 %v477
    %v1518 = vunpack.c.h.b16 %v477
    %v1519 = vunpack.c.l.b16 %v478
    %v1520 = vunpack.c.h.b16 %v478
    %v1521 = vunpack.c.l.b16 %v479
    %v1522 = vunpack.c.h.b16 %v479
    %v1523 = vunpack.c.l.b16 %v480
    %v1524 = vunpack.c.h.b16 %v480
    %v1525 = vunpack.c.l.b16 %v481
    %v1526 = vunpack.c.h.b16 %v481
    %v1527 = vunpack.c.l.b16 %v482
    %v1528 = vunpack.c.h.b16 %v482
    %v1529 = vunpack.c.l.b16 %v483
    %v1530 = vunpack.c.h.b16 %v483
    %v1531 = vunpack.c.l.b16 %v484
    %v1532 = vunpack.c.h.b16 %v484
    %v1533 = vunpack.c.l.b16 %v485
    %v1534 = vunpack.c.h.b16 %v485
    %v1535 = vunpack.c.l.b16 %v486
    %v1536 = vunpack.c.h.b16 %v486
    %v1537 = vunpack.c.l.b16 %v487
    %v1538 = vunpack.c.h.b16 %v487
    %v1539 = vunpack.c.l.b16 %v488
    %v1540 = vunpack.c.h.b16 %v488
    %v1541 = vunpack.c.l.b16 %v489
    %v1542 = vunpack.c.h.b16 %v489
    %v1543 = vunpack.c.l.b16 %v490
    %v1544 = vunpack.c.h.b16 %v490
    %v1545 = vunpack.c.l.b16 %v491
    %v1546 = vunpack.c.h.b16 %v491
    %v1547 = vunpack.c.l.b16 %v492
    %v1548 = vunpack.c.h.b16 %v492
    %v1549 = vunpack.c.l.b16 %v493
    %v1550 = vunpack.c.h.b16 %v493
    %v1551 = vunpack.c.l.b16 %v494
    %v1552 = vunpack.c.h.b16 %v494
    %v1553 = vunpack.c.l.b16 %v495
    %v1554 = vunpack.c.h.b16 %v495
    %v1555 = vunpack.c.l.b16 %v496
    %v1556 = vunpack.c.h.b16 %v496
    %v1557 = vunpack.c.l.b16 %v497
    %v1558 = vunpack.c.h.b16 %v497
    %v1559 = vunpack.c.l.b16 %v498
    %v1560 = vunpack.c.h.b16 %v498
    %v1561 = vunpack.c.l.b16 %v499
    %v1562 = vunpack.c.h.b16 %v499
    %v1563 = vunpack.c.l.b16 %v500
    %v1564 = vunpack.c.h.b16 %v500
    %v1565 = vunpack.c.l.b16 %v501
    %v1566 = vunpack.c.h.b16 %v501
    %v1567 = vunpack.c.l.b16 %v502
    %v1568 = vunpack.c.h.b16 %v502
    %v1569 = vunpack.c.l.b16 %v503
    %v1570 = vunpack.c.h.b16 %v503
    %v1571 = vunpack.c.l.b16 %v504
    %v1572 = vunpack.c.h.b16 %v504
    %v1573 = vunpack.c.l.b16 %v505
    %v1574 = vunpack.c.h.b16 %v505
    %v1575 = vunpack.c.l.b16 %v506
    %v1576 = vunpack.c.h.b16 %v506
    %v1577 = vunpack.c.l.b16 %v507
    %v1578 = vunpack.c.h.b16 %v507
    %v1579 = vunpack.c.l.b16 %v508
    %v1580 = vunpack.c.h.b16 %v508
    %v1581 = vunpack.c.l.b16 %v509
    %v1582 = vunpack.c.h.b16 %v509
    %v1583 = vunpack.c.l.b16 %v510
    %v1584 = vunpack.c.h.b16 %v510
    %v1585 = vunpack.c.l.b16 %v511
    %v1586 = vunpack.c.h.b16 %v511
    %v1587 = vunpack.c.l.b16 %v512
    %v1588 = vunpack.c.h.b16 %v512
    %v1589 = vunpack.c.l.b16 %v513
    %v1590 = vunpack.c.h.b16 %v513
    %v1591 = vunpack.c.l.b16 %v514
    %v1592 = vunpack.c.h.b16 %v514
    %v1593 = vunpack.c.l.b16 %v515
    %v1594 = vunpack.c.h.b16 %v515
    %v1595 = vunpack.c.l.b16 %v516
    %v1596 = vunpack.c.h.b16 %v516
    %v1597 = vunpack.c.l.b16 %v517
    %v1598 = vunpack.c.h.b16 %v517
    %v1599 = vunpack.c.l.b16 %v518
    %v1600 = vunpack.c.h.b16 %v518
    %v1601 = vunpack.c.l.b16 %v519
    %v1602 = vunpack.c.h.b16 %v519
    %v1603 = vunpack.c.l.b16 %v520
    %v1604 = vunpack.c.h.b16 %v520
    %v1605 = vunpack.c.l.b16 %v521
    %v1606 = vunpack.c.h.b16 %v521
    %v1607 = vunpack.c.l.b16 %v522
    %v1608 = vunpack.c.h.b16 %v522
    %v1609 = vunpack.c.l.b16 %v523
    %v1610 = vunpack.c.h.b16 %v523
    %v1611 = vunpack.c.l.b16 %v524
    %v1612 = vunpack.c.h.b16 %v524
    %v1613 = vunpack.c.l.b16 %v525
    %v1614 = vunpack.c.h.b16 %v525
    %v1615 = vunpack.c.l.b16 %v526
    %v1616 = vunpack.c.h.b16 %v526
    %v1617 = vunpack.c.l.b16 %v527
    %v1618 = vunpack.c.h.b16 %v527
    %v1619 = vunpack.c.l.b16 %v528
    %v1620 = vunpack.c.h.b16 %v528
    %v1621 = vunpack.c.l.b16 %v529
    %v1622 = vunpack.c.h.b16 %v529
    %v1623 = vunpack.c.l.b16 %v530
    %v1624 = vunpack.c.h.b16 %v530
    %v1625 = vunpack.c.l.b16 %v531
    %v1626 = vunpack.c.h.b16 %v531
    %v1627 = vunpack.c.l.b16 %v532
    %v1628 = vunpack.c.h.b16 %v532
    %v1629 = vunpack.c.l.b16 %v533
    %v1630 = vunpack.c.h.b16 %v533
    %v1631 = vunpack.c.l.b16 %v534
    %v1632 = vunpack.c.h.b16 %v534
    %v1633 = vunpack.c.l.b16 %v535
    %v1634 = vunpack.c.h.b16 %v535
    %v1635 = vunpack.c.l.b16 %v536
    %v1636 = vunpack.c.h.b16 %v536
    %v1637 = vunpack.c.l.b16 %v537
    %v1638 = vunpack.c.h.b16 %v537
    %v1639 = vunpack.c.l.b16 %v538
    %v1640 = vunpack.c.h.b16 %v538
    %v1641 = vunpack.c.l.b16 %v539
    %v1642 = vunpack.c.h.b16 %v539
    %v1643 = vunpack.c.l.b16 %v540
    %v1644 = vunpack.c.h.b16 %v540
    %v1645 = vunpack.c.l.b16 %v541
    %v1646 = vunpack.c.h.b16 %v541
    %v1647 = vunpack.c.l.b16 %v542
    %v1648 = vunpack.c.h.b16 %v542
    %v1649 = vunpack.c.l.b16 %v543
    %v1650 = vunpack.c.h.b16 %v543
    %v1651 = vunpack.c.l.b16 %v544
    %v1652 = vunpack.c.h.b16 %v544
    %v1653 = vunpack.c.l.b16 %v545
    %v1654 = vunpack.c.h.b16 %v545
    %v1655 = vunpack.c.l.b16 %v546
    %v1656 = vunpack.c.h.b16 %v546
    %v1657 = vunpack.c.l.b16 %v547
    %v1658 = vunpack.c.h.b16 %v547
    %v1659 = vunpack.c.l.b16 %v548
    %v1660 = vunpack.c.h.b16 %v548
    %v1661 = vunpack.c.l.b16 %v549
    %v1662 = vunpack.c.h.b16 %v549
    %v1663 = vunpack.c.l.b16 %v550
    %v1664 = vunpack.c.h.b16 %v550
    %v1665 = vunpack.c.l.b16 %v551
    %v1666 = vunpack.c.h.b16 %v551
    %v1667 = vunpack.c.l.b16 %v552
    %v1668 = vunpack.c.h.b16 %v552
    %v1669 = vunpack.c.l.b16 %v553
    %v1670 = vunpack.c.h.b16 %v553
    %v1671 = vunpack.c.l.b16 %v554
    %v1672 = vunpack.c.h.b16 %v554
    %v1673 = vunpack.c.l.b16 %v555
    %v1674 = vunpack.c.h.b16 %v555
    %v1675 = vunpack.c.l.b16 %v556
    %v1676 = vunpack.c.h.b16 %v556
    %v1677 = vunpack.c.l.b16 %v557
    %v1678 = vunpack.c.h.b16 %v557
    %v1679 = vunpack.c.l.b16 %v558
    %v1680 = vunpack.c.h.b16 %v558
    %v1681 = vunpack.c.l.b16 %v559
    %v1682 = vunpack.c.h.b16 %v559
    %v1683 = vunpack.c.l.b16 %v560
    %v1684 = vunpack.c.h.b16 %v560
    %v1685 = vunpack.c.l.b16 %v561
    %v1686 = vunpack.c.h.b16 %v561
    %v1687 = vunpack.c.l.b16 %v562
    %v1688 = vunpack.c.h.b16 %v562
    %v1689 = vunpack.c.l.b16 %v563
    %v1690 = vunpack.c.h.b16 %v563
    %v1691 = vunpack.c.l.b16 %v564
    %v1692 = vunpack.c.h.b16 %v564
    %v1693 = vunpack.c.l.b16 %v565
    %v1694 = vunpack.c.h.b16 %v565
    %v1695 = vunpack.c.l.b16 %v566
    %v1696 = vunpack.c.h.b16 %v566
    %v1697 = vunpack.c.l.b16 %v567
    %v1698 = vunpack.c.h.b16 %v567
    %v1699 = vunpack.c.l.b16 %v568
    %v1700 = vunpack.c.h.b16 %v568
    %v1701 = vunpack.c.l.b16 %v569
    %v1702 = vunpack.c.h.b16 %v569
    %v1703 = vunpack.c.l.b16 %v570
    %v1704 = vunpack.c.h.b16 %v570
    %v1705 = vunpack.c.l.b16 %v571
    %v1706 = vunpack.c.h.b16 %v571
    %v1707 = vunpack.c.l.b16 %v572
    %v1708 = vunpack.c.h.b16 %v572
    %v1709 = vunpack.c.l.b16 %v573
    %v1710 = vunpack.c.h.b16 %v573
    %v1711 = vunpack.c.l.b16 %v574
    %v1712 = vunpack.c.h.b16 %v574
    %v1713 = vunpack.c.l.b16 %v575
    %v1714 = vunpack.c.h.b16 %v575
    %v1715 = vunpack.c.l.b16 %v576
    %v1716 = vunpack.c.h.b16 %v576
    %v1717 = vunpack.c.l.b16 %v577
    %v1718 = vunpack.c.h.b16 %v577
    %v1719 = vunpack.c.l.b16 %v578
    %v1720 = vunpack.c.h.b16 %v578
    %v1721 = vunpack.c.l.b16 %v579
    %v1722 = vunpack.c.h.b16 %v579
    %v1723 = vunpack.c.l.b16 %v580
    %v1724 = vunpack.c.h.b16 %v580
    %v1725 = vunpack.c.l.b16 %v581
    %v1726 = vunpack.c.h.b16 %v581
    %v1727 = vunpack.c.l.b16 %v582
    %v1728 = vunpack.c.h.b16 %v582
    %v1729 = vunpack.c.l.b16 %v583
    %v1730 = vunpack.c.h.b16 %v583
    %v1731 = vunpack.c.l.b16 %v584
    %v1732 = vunpack.c.h.b16 %v584
    %v1733 = vunpack.c.l.b16 %v585
    %v1734 = vunpack.c.h.b16 %v585
    %v1735 = vunpack.c.l.b16 %v586
    %v1736 = vunpack.c.h.b16 %v586
    %v1737 = vunpack.c.l.b16 %v587
    %v1738 = vunpack.c.h.b16 %v587
    %v1739 = vunpack.c.l.b16 %v588
    %v1740 = vunpack.c.h.b16 %v588
    %v1741 = vunpack.c.l.b16 %v589
    %v1742 = vunpack.c.h.b16 %v589
    %v1743 = vunpack.c.l.b16 %v590
    %v1744 = vunpack.c.h.b16 %v590
    %v1745 = vunpack.c.l.b16 %v591
    %v1746 = vunpack.c.h.b16 %v591
    %v1747 = vunpack.c.l.b16 %v592
    %v1748 = vunpack.c.h.b16 %v592
    %v1749 = vunpack.c.l.b16 %v593
    %v1750 = vunpack.c.h.b16 %v593
    %v1751 = vunpack.c.l.b16 %v594
    %v1752 = vunpack.c.h.b16 %v594
    %v1753 = vpack.c.b16 %v987, %v985
    %v1754 = vpack.c.b16 %v988, %v986
    %v1755 = vpack.c.b16 %v991, %v989
    %v1756 = vpack.c.b16 %v992, %v990
    %v1757 = vpack.c.b16 %v995, %v993
    %v1758 = vpack.c.b16 %v996, %v994
    %v1759 = vpack.c.b16 %v999, %v997
    %v1760 = vpack.c.b16 %v1000, %v998
    %v1761 = vpack.c.b16 %v1003, %v1001
    %v1762 = vpack.c.b16 %v1004, %v1002
    %v1763 = vpack.c.b16 %v1007, %v1005
    %v1764 = vpack.c.b16 %v1008, %v1006
    %v1765 = vpack.c.b16 %v1011, %v1009
    %v1766 = vpack.c.b16 %v1012, %v1010
    %v1767 = vpack.c.b16 %v1015, %v1013
    %v1768 = vpack.c.b16 %v1016, %v1014
    %v1769 = vpack.c.b16 %v1019, %v1017
    %v1770 = vpack.c.b16 %v1020, %v1018
    %v1771 = vpack.c.b16 %v1023, %v1021
    %v1772 = vpack.c.b16 %v1024, %v1022
    %v1773 = vpack.c.b16 %v1027, %v1025
    %v1774 = vpack.c.b16 %v1028, %v1026
    %v1775 = vpack.c.b16 %v1031, %v1029
    %v1776 = vpack.c.b16 %v1032, %v1030
    %v1777 = vpack.c.b16 %v1035, %v1033
    %v1778 = vpack.c.b16 %v1036, %v1034
    %v1779 = vpack.c.b16 %v1039, %v1037
    %v1780 = vpack.c.b16 %v1040, %v1038
    %v1781 = vpack.c.b16 %v1043, %v1041
    %v1782 = vpack.c.b16 %v1044, %v1042
    %v1783 = vpack.c.b16 %v1047, %v1045
    %v1784 = vpack.c.b16 %v1048, %v1046
    %v1785 = vpack.c.b16 %v1051, %v1049
    %v1786 = vpack.c.b16 %v1052, %v1050
    %v1787 = vpack.c.b16 %v1055, %v1053
    %v1788 = vpack.c.b16 %v1056, %v1054
    %v1789 = vpack.c.b16 %v1059, %v1057
    %v1790 = vpack.c.b16 %v1060, %v1058
    %v1791 = vpack.c.b16 %v1063, %v1061
    %v1792 = vpack.c.b16 %v1064, %v1062
    %v1793 = vpack.c.b16 %v1067, %v1065
    %v1794 = vpack.c.b16 %v1068, %v1066
    %v1795 = vpack.c.b16 %v1071, %v1069
    %v1796 = vpack.c.b16 %v1072, %v1070
    %v1797 = vpack.c.b16 %v1075, %v1073
    %v1798 = vpack.c.b16 %v1076, %v1074
    %v1799 = vpack.c.b16 %v1079, %v1077
    %v1800 = vpack.c.b16 %v1080, %v1078
    %v1801 = vpack.c.b16 %v1083, %v1081
    %v1802 = vpack.c.b16 %v1084, %v1082
    %v1803 = vpack.c.b16 %v1087, %v1085
    %v1804 = vpack.c.b16 %v1088, %v1086
    %v1805 = vpack.c.b16 %v1091, %v1089
    %v1806 = vpack.c.b16 %v1092, %v1090
    %v1807 = vpack.c.b16 %v1095, %v1093
    %v1808 = vpack.c.b16 %v1096, %v1094
    %v1809 = vpack.c.b16 %v1099, %v1097
    %v1810 = vpack.c.b16 %v1100, %v1098
    %v1811 = vpack.c.b16 %v1103, %v1101
    %v1812 = vpack.c.b16 %v1104, %v1102
    %v1813 = vpack.c.b16 %v1107, %v1105
    %v1814 = vpack.c.b16 %v1108, %v1106
    %v1815 = vpack.c.b16 %v1111, %v1109
    %v1816 = vpack.c.b16 %v1112, %v1110
    %v1817 = vpack.c.b16 %v1115, %v1113
    %v1818 = vpack.c.b16 %v1116, %v1114
    %v1819 = vpack.c.b16 %v1119, %v1117
    %v1820 = vpack.c.b16 %v1120, %v1118
    %v1821 = vpack.c.b16 %v1123, %v1121
    %v1822 = vpack.c.b16 %v1124, %v1122
    %v1823 = vpack.c.b16 %v1127, %v1125
    %v1824 = vpack.c.b16 %v1128, %v1126
    %v1825 = vpack.c.b16 %v1131, %v1129
    %v1826 = vpack.c.b16 %v1132, %v1130
    %v1827 = vpack.c.b16 %v1135, %v1133
    %v1828 = vpack.c.b16 %v1136, %v1134
    %v1829 = vpack.c.b16 %v1139, %v1137
    %v1830 = vpack.c.b16 %v1140, %v1138
    %v1831 = vpack.c.b16 %v1143, %v1141
    %v1832 = vpack.c.b16 %v1144, %v1142
    %v1833 = vpack.c.b16 %v1147, %v1145
    %v1834 = vpack.c.b16 %v1148, %v1146
    %v1835 = vpack.c.b16 %v1151, %v1149
    %v1836 = vpack.c.b16 %v1152, %v1150
    %v1837 = vpack.c.b16 %v1155, %v1153
    %v1838 = vpack.c.b16 %v1156, %v1154
    %v1839 = vpack.c.b16 %v1159, %v1157
    %v1840 = vpack.c.b16 %v1160, %v1158
    %v1841 = vpack.c.b16 %v1163, %v1161
    %v1842 = vpack.c.b16 %v1164, %v1162
    %v1843 = vpack.c.b16 %v1167, %v1165
    %v1844 = vpack.c.b16 %v1168, %v1166
    %v1845 = vpack.c.b16 %v1171, %v1169
    %v1846 = vpack.c.b16 %v1172, %v1170
    %v1847 = vpack.c.b16 %v1175, %v1173
    %v1848 = vpack.c.b16 %v1176, %v1174
    %v1849 = vpack.c.b16 %v1179, %v1177
    %v1850 = vpack.c.b16 %v1180, %v1178
    %v1851 = vpack.c.b16 %v1183, %v1181
    %v1852 = vpack.c.b16 %v1184, %v1182
    %v1853 = vpack.c.b16 %v1187, %v1185
    %v1854 = vpack.c.b16 %v1188, %v1186
    %v1855 = vpack.c.b16 %v1191, %v1189
    %v1856 = vpack.c.b16 %v1192, %v1190
    %v1857 = vpack.c.b16 %v1195, %v1193
    %v1858 = vpack.c.b16 %v1196, %v1194
    %v1859 = vpack.c.b16 %v1199, %v1197
    %v1860 = vpack.c.b16 %v1200, %v1198
    %v1861 = vpack.c.b16 %v1203, %v1201
    %v1862 = vpack.c.b16 %v1204, %v1202
    %v1863 = vpack.c.b16 %v1207, %v1205
    %v1864 = vpack.c.b16 %v1208, %v1206
    %v1865 = vpack.c.b16 %v1211, %v1209
    %v1866 = vpack.c.b16 %v1212, %v1210
    %v1867 = vpack.c.b16 %v1215, %v1213
    %v1868 = vpack.c.b16 %v1216, %v1214
    %v1869 = vpack.c.b16 %v1219, %v1217
    %v1870 = vpack.c.b16 %v1220, %v1218
    %v1871 = vpack.c.b16 %v1223, %v1221
    %v1872 = vpack.c.b16 %v1224, %v1222
    %v1873 = vpack.c.b16 %v1227, %v1225
    %v1874 = vpack.c.b16 %v1228, %v1226
    %v1875 = vpack.c.b16 %v1231, %v1229
    %v1876 = vpack.c.b16 %v1232, %v1230
    %v1877 = vpack.c.b16 %v1235, %v1233
    %v1878 = vpack.c.b16 %v1236, %v1234
    %v1879 = vpack.c.b16 %v1239, %v1237
    %v1880 = vpack.c.b16 %v1240, %v1238
    %v1881 = vpack.c.b16 %v1243, %v1241
    %v1882 = vpack.c.b16 %v1244, %v1242
    %v1883 = vpack.c.b16 %v1247, %v1245
    %v1884 = vpack.c.b16 %v1248, %v1246
    %v1885 = vpack.c.b16 %v1251, %v1249
    %v1886 = vpack.c.b16 %v1252, %v1250
    %v1887 = vpack.c.b16 %v1255, %v1253
    %v1888 = vpack.c.b16 %v1256, %v1254
    %v1889 = vpack.c.b16 %v1259, %v1257
    %v1890 = vpack.c.b16 %v1260, %v1258
    %v1891 = vpack.c.b16 %v1263, %v1261
    %v1892 = vpack.c.b16 %v1264, %v1262
    %v1893 = vpack.c.b16 %v1267, %v1265
    %v1894 = vpack.c.b16 %v1268, %v1266
    %v1895 = vpack.c.b16 %v1271, %v1269
    %v1896 = vpack.c.b16 %v1272, %v1270
    %v1897 = vpack.c.b16 %v1275, %v1273
    %v1898 = vpack.c.b16 %v1276, %v1274
    %v1899 = vpack.c.b16 %v1279, %v1277
    %v1900 = vpack.c.b16 %v1280, %v1278
    %v1901 = vpack.c.b16 %v1283, %v1281
    %v1902 = vpack.c.b16 %v1284, %v1282
    %v1903 = vpack.c.b16 %v1287, %v1285
    %v1904 = vpack.c.b16 %v1288, %v1286
    %v1905 = vpack.c.b16 %v1291, %v1289
    %v1906 = vpack.c.b16 %v1292, %v1290
    %v1907 = vpack.c.b16 %v1295, %v1293
    %v1908 = vpack.c.b16 %v1296, %v1294
    %v1909 = vpack.c.b16 %v1299, %v1297
    %v1910 = vpack.c.b16 %v1300, %v1298
    %v1911 = vpack.c.b16 %v1303, %v1301
    %v1912 = vpack.c.b16 %v1304, %v1302
    %v1913 = vpack.c.b16 %v1307, %v1305
    %v1914 = vpack.c.b16 %v1308, %v1306
    %v1915 = vpack.c.b16 %v1311, %v1309
    %v1916 = vpack.c.b16 %v1312, %v1310
    %v1917 = vpack.c.b16 %v1315, %v1313
    %v1918 = vpack.c.b16 %v1316, %v1314
    %v1919 = vpack.c.b16 %v1319, %v1317
    %v1920 = vpack.c.b16 %v1320, %v1318
    %v1921 = vpack.c.b16 %v1323, %v1321
    %v1922 = vpack.c.b16 %v1324, %v1322
    %v1923 = vpack.c.b16 %v1327, %v1325
    %v1924 = vpack.c.b16 %v1328, %v1326
    %v1925 = vpack.c.b16 %v1331, %v1329
    %v1926 = vpack.c.b16 %v1332, %v1330
    %v1927 = vpack.c.b16 %v1335, %v1333
    %v1928 = vpack.c.b16 %v1336, %v1334
    %v1929 = vpack.c.b16 %v1339, %v1337
    %v1930 = vpack.c.b16 %v1340, %v1338
    %v1931 = vpack.c.b16 %v1343, %v1341
    %v1932 = vpack.c.b16 %v1344, %v1342
    %v1933 = vpack.c.b16 %v1347, %v1345
    %v1934 = vpack.c.b16 %v1348, %v1346
    %v1935 = vpack.c.b16 %v1351, %v1349
    %v1936 = vpack.c.b16 %v1352, %v1350
    %v1937 = vpack.c.b16 %v1355, %v1353
    %v1938 = vpack.c.b16 %v1356, %v1354
    %v1939 = vpack.c.b16 %v1359, %v1357
    %v1940 = vpack.c.b16 %v1360, %v1358
    %v1941 = vpack.c.b16 %v1363, %v1361
    %v1942 = vpack.c.b16 %v1364, %v1362
    %v1943 = vpack.c.b16 %v1367, %v1365
    %v1944 = vpack.c.b16 %v1368, %v1366
    %v1945 = vpack.c.b16 %v1371, %v1369
    %v1946 = vpack.c.b16 %v1372, %v1370
    %v1947 = vpack.c.b16 %v1375, %v1373
    %v1948 = vpack.c.b16 %v1376, %v1374
    %v1949 = vpack.c.b16 %v1379, %v1377
    %v1950 = vpack.c.b16 %v1380, %v1378
    %v1951 = vpack.c.b16 %v1383, %v1381
    %v1952 = vpack.c.b16 %v1384, %v1382
    %v1953 = vpack.c.b16 %v1387, %v1385
    %v1954 = vpack.c.b16 %v1388, %v1386
    %v1955 = vpack.c.b16 %v1391, %v1389
    %v1956 = vpack.c.b16 %v1392, %v1390
    %v1957 = vpack.c.b16 %v1395, %v1393
    %v1958 = vpack.c.b16 %v1396, %v1394
    %v1959 = vpack.c.b16 %v1399, %v1397
    %v1960 = vpack.c.b16 %v1400, %v1398
    %v1961 = vpack.c.b16 %v1403, %v1401
    %v1962 = vpack.c.b16 %v1404, %v1402
    %v1963 = vpack.c.b16 %v1407, %v1405
    %v1964 = vpack.c.b16 %v1408, %v1406
    %v1965 = vpack.c.b16 %v1411, %v1409
    %v1966 = vpack.c.b16 %v1412, %v1410
    %v1967 = vpack.c.b16 %v1415, %v1413
    %v1968 = vpack.c.b16 %v1416, %v1414
    %v1969 = vpack.c.b16 %v1419, %v1417
    %v1970 = vpack.c.b16 %v1420, %v1418
    %v1971 = vpack.c.b16 %v1423, %v1421
    %v1972 = vpack.c.b16 %v1424, %v1422
    %v1973 = vpack.c.b16 %v1427, %v1425
    %v1974 = vpack.c.b16 %v1428, %v1426
    %v1975 = vpack.c.b16 %v1431, %v1429
    %v1976 = vpack.c.b16 %v1432, %v1430
    %v1977 = vpack.c.b16 %v1435, %v1433
    %v1978 = vpack.c.b16 %v1436, %v1434
    %v1979 = vpack.c.b16 %v1439, %v1437
    %v1980 = vpack.c.b16 %v1440, %v1438
    %v1981 = vpack.c.b16 %v1443, %v1441
    %v1982 = vpack.c.b16 %v1444, %v1442
    %v1983 = vpack.c.b16 %v1447, %v1445
    %v1984 = vpack.c.b16 %v1448, %v1446
    %v1985 = vpack.c.b16 %v1451, %v1449
    %v1986 = vpack.c.b16 %v1452, %v1450
    %v1987 = vpack.c.b16 %v1455, %v1453
    %v1988 = vpack.c.b16 %v1456, %v1454
    %v1989 = vpack.c.b16 %v1459, %v1457
    %v1990 = vpack.c.b16 %v1460, %v1458
    %v1991 = vpack.c.b16 %v1463, %v1461
    %v1992 = vpack.c.b16 %v1464, %v1462
    %v1993 = vpack.c.b16 %v1467, %v1465
    %v1994 = vpack.c.b16 %v1468, %v1466
    %v1995 = vpack.c.b16 %v1471, %v1469
    %v1996 = vpack.c.b16 %v1472, %v1470
    %v1997 = vpack.c.b16 %v1475, %v1473
    %v1998 = vpack.c.b16 %v1476, %v1474
    %v1999 = vpack.c.b16 %v1479, %v1477
    %v2000 = vpack.c.b16 %v1480, %v1478
    %v2001 = vpack.c.b16 %v1483, %v1481
    %v2002 = vpack.c.b16 %v1484, %v1482
    %v2003 = vpack.c.b16 %v1487, %v1485
    %v2004 = vpack.c.b16 %v1488, %v1486
    %v2005 = vpack.c.b16 %v1491, %v1489
    %v2006 = vpack.c.b16 %v1492, %v1490
    %v2007 = vpack.c.b16 %v1495, %v1493
    %v2008 = vpack.c.b16 %v1496, %v1494
    %v2009 = vpack.c.b16 %v1499, %v1497
    %v2010 = vpack.c.b16 %v1500, %v1498
    %v2011 = vpack.c.b16 %v1503, %v1501
    %v2012 = vpack.c.b16 %v1504, %v1502
    %v2013 = vpack.c.b16 %v1507, %v1505
    %v2014 = vpack.c.b16 %v1508, %v1506
    %v2015 = vpack.c.b16 %v1511, %v1509
    %v2016 = vpack.c.b16 %v1512, %v1510
    %v2017 = vpack.c.b16 %v1515, %v1513
    %v2018 = vpack.c.b16 %v1516, %v1514
    %v2019 = vpack.c.b16 %v1519, %v1517
    %v2020 = vpack.c.b16 %v1520, %v1518
    %v2021 = vpack.c.b16 %v1523, %v1521
    %v2022 = vpack.c.b16 %v1524, %v1522
    %v2023 = vpack.c.b16 %v1527, %v1525
    %v2024 = vpack.c.b16 %v1528, %v1526
    %v2025 = vpack.c.b16 %v1531, %v1529
    %v2026 = vpack.c.b16 %v1532, %v1530
    %v2027 = vpack.c.b16 %v1535, %v1533
    %v2028 = vpack.c.b16 %v1536, %v1534
    %v2029 = vpack.c.b16 %v1539, %v1537
    %v2030 = vpack.c.b16 %v1540, %v1538
    %v2031 = vpack.c.b16 %v1543, %v1541
    %v2032 = vpack.c.b16 %v1544, %v1542
    %v2033 = vpack.c.b16 %v1547, %v1545
    %v2034 = vpack.c.b16 %v1548, %v1546
    %v2035 = vpack.c.b16 %v1551, %v1549
    %v2036 = vpack.c.b16 %v1552, %v1550
    %v2037 = vpack.c.b16 %v1555, %v1553
    %v2038 = vpack.c.b16 %v1556, %v1554
    %v2039 = vpack.c.b16 %v1559, %v1557
    %v2040 = vpack.c.b16 %v1560, %v1558
    %v2041 = vpack.c.b16 %v1563, %v1561
    %v2042 = vpack.c.b16 %v1564, %v1562
    %v2043 = vpack.c.b16 %v1567, %v1565
    %v2044 = vpack.c.b16 %v1568, %v1566
    %v2045 = vpack.c.b16 %v1571, %v1569
    %v2046 = vpack.c.b16 %v1572, %v1570
    %v2047 = vpack.c.b16 %v1575, %v1573
    %v2048 = vpack.c.b16 %v1576, %v1574
    %v2049 = vpack.c.b16 %v1579, %v1577
    %v2050 = vpack.c.b16 %v1580, %v1578
    %v2051 = vpack.c.b16 %v1583, %v1581
    %v2052 = vpack.c.b16 %v1584, %v1582
    %v2053 = vpack.c.b16 %v1587, %v1585
    %v2054 = vpack.c.b16 %v1588, %v1586
    %v2055 = vpack.c.b16 %v1591, %v1589
    %v2056 = vpack.c.b16 %v1592, %v1590
    %v2057 = vpack.c.b16 %v1595, %v1593
    %v2058 = vpack.c.b16 %v1596, %v1594
    %v2059 = vpack.c.b16 %v1599, %v1597
    %v2060 = vpack.c.b16 %v1600, %v1598
    %v2061 = vpack.c.b16 %v1603, %v1601
    %v2062 = vpack.c.b16 %v1604, %v1602
    %v2063 = vpack.c.b16 %v1607, %v1605
    %v2064 = vpack.c.b16 %v1608, %v1606
    %v2065 = vpack.c.b16 %v1611, %v1609
    %v2066 = vpack.c.b16 %v1612, %v1610
    %v2067 = vpack.c.b16 %v1615, %v1613
    %v2068 = vpack.c.b16 %v1616, %v1614
    %v2069 = vpack.c.b16 %v1619, %v1617
    %v2070 = vpack.c.b16 %v1620, %v1618
    %v2071 = vpack.c.b16 %v1623, %v1621
    %v2072 = vpack.c.b16 %v1624, %v1622
    %v2073 = vpack.c.b16 %v1627, %v1625
    %v2074 = vpack.c.b16 %v1628, %v1626
    %v2075 = vpack.c.b16 %v1631, %v1629
    %v2076 = vpack.c.b16 %v1632, %v1630
    %v2077 = vpack.c.b16 %v1635, %v1633
    %v2078 = vpack.c.b16 %v1636, %v1634
    %v2079 = vpack.c.b16 %v1639, %v1637
    %v2080 = vpack.c.b16 %v1640, %v1638
    %v2081 = vpack.c.b16 %v1643, %v1641
    %v2082 = vpack.c.b16 %v1644, %v1642
    %v2083 = vpack.c.b16 %v1647, %v1645
    %v2084 = vpack.c.b16 %v1648, %v1646
    %v2085 = vpack.c.b16 %v1651, %v1649
    %v2086 = vpack.c.b16 %v1652, %v1650
    %v2087 = vpack.c.b16 %v1655, %v1653
    %v2088 = vpack.c.b16 %v1656, %v1654
    %v2089 = vpack.c.b16 %v1659, %v1657
    %v2090 = vpack.c.b16 %v1660, %v1658
    %v2091 = vpack.c.b16 %v1663, %v1661
    %v2092 = vpack.c.b16 %v1664, %v1662
    %v2093 = vpack.c.b16 %v1667, %v1665
    %v2094 = vpack.c.b16 %v1668, %v1666
    %v2095 = vpack.c.b16 %v1671, %v1669
    %v2096 = vpack.c.b16 %v1672, %v1670
    %v2097 = vpack.c.b16 %v1675, %v1673
    %v2098 = vpack.c.b16 %v1676, %v1674
    %v2099 = vpack.c.b16 %v1679, %v1677
    %v2100 = vpack.c.b16 %v1680, %v1678
    %v2101 = vpack.c.b16 %v1683, %v1681
    %v2102 = vpack.c.b16 %v1684, %v1682
    %v2103 = vpack.c.b16 %v1687, %v1685
    %v2104 = vpack.c.b16 %v1688, %v1686
    %v2105 = vpack.c.b16 %v1691, %v1689
    %v2106 = vpack.c.b16 %v1692, %v1690
    %v2107 = vpack.c.b16 %v1695, %v1693
    %v2108 = vpack.c.b16 %v1696, %v1694
    %v2109 = vpack.c.b16 %v1699, %v1697
    %v2110 = vpack.c.b16 %v1700, %v1698
    %v2111 = vpack.c.b16 %v1703, %v1701
    %v2112 = vpack.c.b16 %v1704, %v1702
    %v2113 = vpack.c.b16 %v1707, %v1705
    %v2114 = vpack.c.b16 %v1708, %v1706
    %v2115 = vpack.c.b16 %v1711, %v1709
    %v2116 = vpack.c.b16 %v1712, %v1710
    %v2117 = vpack.c.b16 %v1715, %v1713
    %v2118 = vpack.c.b16 %v1716, %v1714
    %v2119 = vpack.c.b16 %v1719, %v1717
    %v2120 = vpack.c.b16 %v1720, %v1718
    %v2121 = vpack.c.b16 %v1723, %v1721
    %v2122 = vpack.c.b16 %v1724, %v1722
    %v2123 = vpack.c.b16 %v1727, %v1725
    %v2124 = vpack.c.b16 %v1728, %v1726
    %v2125 = vpack.c.b16 %v1731, %v1729
    %v2126 = vpack.c.b16 %v1732, %v1730
    %v2127 = vpack.c.b16 %v1735, %v1733
    %v2128 = vpack.c.b16 %v1736, %v1734
    %v2129 = vpack.c.b16 %v1739, %v1737
    %v2130 = vpack.c.b16 %v1740, %v1738
    %v2131 = vpack.c.b16 %v1743, %v1741
    %v2132 = vpack.c.b16 %v1744, %v1742
    %v2133 = vpack.c.b16 %v1747, %v1745
    %v2134 = vpack.c.b16 %v1748, %v1746
    %v2135 = vpack.c.b16 %v1751, %v1749
    %v2136 = vpack.c.b16 %v1752, %v1750
    %2521 = vmatpush.bf16.msra.mxu0 %v1767
    %2522 = vmatpush.bf16.msra.mxu0 %v1765
    %2523 = vmatpush.bf16.msra.mxu0 %v1763
    %2524 = vmatpush.bf16.msra.mxu0 %v1761
    %2525 = vmatpush.bf16.msra.mxu0 %v1759
    %2526 = vmatpush.bf16.msra.mxu0 %v1757
    %2527 = vmatpush.bf16.msra.mxu0 %v1755
    %2528 = vmatpush.bf16.msra.mxu0 %v1753
    %2529 = vmatmul.bf16.gmra.mxu0 %v187
    %v2530 = vpop.f32.mrf.mxu0
    %v2531 = vadd.f32 %v597, %v2530
    %v2532 = vpop.f32.mrf.mxu0
    %2533 = vdwg.mxu0
    %2534 = vmatpush.bf16.msra.mxu0 %v1783
    %2535 = vmatpush.bf16.msra.mxu0 %v1781
    %2536 = vmatpush.bf16.msra.mxu0 %v1779
    %2537 = vmatpush.bf16.msra.mxu0 %v1777
    %2538 = vmatpush.bf16.msra.mxu0 %v1775
    %2539 = vmatpush.bf16.msra.mxu0 %v1773
    %2540 = vmatpush.bf16.msra.mxu0 %v1771
    %2541 = vmatpush.bf16.msra.mxu0 %v1769
    %2542 = vmatmul.bf16.gmra.mxu0 %v188
    %v2543 = vpop.f32.mrf.mxu0
    %v2544 = vadd.f32 %v2531, %v2543
    %v2545 = vpop.f32.mrf.mxu0
    %2546 = vdwg.mxu0
    %2547 = vmatpush.bf16.msra.mxu0 %v1799
    %2548 = vmatpush.bf16.msra.mxu0 %v1797
    %2549 = vmatpush.bf16.msra.mxu0 %v1795
    %2550 = vmatpush.bf16.msra.mxu0 %v1793
    %2551 = vmatpush.bf16.msra.mxu0 %v1791
    %2552 = vmatpush.bf16.msra.mxu0 %v1789
    %2553 = vmatpush.bf16.msra.mxu0 %v1787
    %2554 = vmatpush.bf16.msra.mxu0 %v1785
    %2555 = vmatmul.bf16.gmra.mxu0 %v189
    %v2556 = vpop.f32.mrf.mxu0
    %v2557 = vadd.f32 %v2544, %v2556
    %v2558 = vpop.f32.mrf.mxu0
    %2559 = vdwg.mxu0
    %2560 = vmatpush.bf16.msra.mxu0 %v1815
    %2561 = vmatpush.bf16.msra.mxu0 %v1813
    %2562 = vmatpush.bf16.msra.mxu0 %v1811
    %2563 = vmatpush.bf16.msra.mxu0 %v1809
    %2564 = vmatpush.bf16.msra.mxu0 %v1807
    %2565 = vmatpush.bf16.msra.mxu0 %v1805
    %2566 = vmatpush.bf16.msra.mxu0 %v1803
    %2567 = vmatpush.bf16.msra.mxu0 %v1801
    %2568 = vmatmul.bf16.gmra.mxu0 %v190
    %v2569 = vpop.f32.mrf.mxu0
    %v2570 = vadd.f32 %v2557, %v2569
    %v2571 = vpop.f32.mrf.mxu0
    %2572 = vdwg.mxu0
    %2573 = vmatpush.bf16.msra.mxu0 %v1831
    %2574 = vmatpush.bf16.msra.mxu0 %v1829
    %2575 = vmatpush.bf16.msra.mxu0 %v1827
    %2576 = vmatpush.bf16.msra.mxu0 %v1825
    %2577 = vmatpush.bf16.msra.mxu0 %v1823
    %2578 = vmatpush.bf16.msra.mxu0 %v1821
    %2579 = vmatpush.bf16.msra.mxu0 %v1819
    %2580 = vmatpush.bf16.msra.mxu0 %v1817
    %2581 = vmatmul.bf16.gmra.mxu0 %v191
    %v2582 = vpop.f32.mrf.mxu0
    %v2583 = vadd.f32 %v2570, %v2582
    %v2584 = vpop.f32.mrf.mxu0
    %2585 = vdwg.mxu0
    %2586 = vmatpush.bf16.msra.mxu0 %v1847
    %2587 = vmatpush.bf16.msra.mxu0 %v1845
    %2588 = vmatpush.bf16.msra.mxu0 %v1843
    %2589 = vmatpush.bf16.msra.mxu0 %v1841
    %2590 = vmatpush.bf16.msra.mxu0 %v1839
    %2591 = vmatpush.bf16.msra.mxu0 %v1837
    %2592 = vmatpush.bf16.msra.mxu0 %v1835
    %2593 = vmatpush.bf16.msra.mxu0 %v1833
    %2594 = vmatmul.bf16.gmra.mxu0 %v192
    %v2595 = vpop.f32.mrf.mxu0
    %v2596 = vadd.f32 %v2583, %v2595
    %v2597 = vpop.f32.mrf.mxu0
    %2598 = vdwg.mxu0
    %2599 = vmatpush.bf16.msra.mxu0 %v1863
    %2600 = vmatpush.bf16.msra.mxu0 %v1861
    %2601 = vmatpush.bf16.msra.mxu0 %v1859
    %2602 = vmatpush.bf16.msra.mxu0 %v1857
    %2603 = vmatpush.bf16.msra.mxu0 %v1855
    %2604 = vmatpush.bf16.msra.mxu0 %v1853
    %2605 = vmatpush.bf16.msra.mxu0 %v1851
    %2606 = vmatpush.bf16.msra.mxu0 %v1849
    %2607 = vmatmul.bf16.gmra.mxu0 %v193
    %v2608 = vpop.f32.mrf.mxu0
    %v2609 = vadd.f32 %v2596, %v2608
    %v2610 = vpop.f32.mrf.mxu0
    %2611 = vdwg.mxu0
    %2612 = vmatpush.bf16.msra.mxu0 %v1879
    %2613 = vmatpush.bf16.msra.mxu0 %v1877
    %2614 = vmatpush.bf16.msra.mxu0 %v1875
    %2615 = vmatpush.bf16.msra.mxu0 %v1873
    %2616 = vmatpush.bf16.msra.mxu0 %v1871
    %2617 = vmatpush.bf16.msra.mxu0 %v1869
    %2618 = vmatpush.bf16.msra.mxu0 %v1867
    %2619 = vmatpush.bf16.msra.mxu0 %v1865
    %2620 = vmatmul.bf16.gmra.mxu0 %v194
    %v2621 = vpop.f32.mrf.mxu0
    %v2622 = vadd.f32 %v2609, %v2621
    %v2623 = vpop.f32.mrf.mxu0
    %2624 = vdwg.mxu0
    %2625 = vmatpush.bf16.msra.mxu0 %v1895
    %2626 = vmatpush.bf16.msra.mxu0 %v1893
    %2627 = vmatpush.bf16.msra.mxu0 %v1891
    %2628 = vmatpush.bf16.msra.mxu0 %v1889
    %2629 = vmatpush.bf16.msra.mxu0 %v1887
    %2630 = vmatpush.bf16.msra.mxu0 %v1885
    %2631 = vmatpush.bf16.msra.mxu0 %v1883
    %2632 = vmatpush.bf16.msra.mxu0 %v1881
    %2633 = vmatmul.bf16.gmra.mxu0 %v195
    %v2634 = vpop.f32.mrf.mxu0
    %v2635 = vadd.f32 %v2622, %v2634
    %v2636 = vpop.f32.mrf.mxu0
    %2637 = vdwg.mxu0
    %2638 = vmatpush.bf16.msra.mxu0 %v1911
    %2639 = vmatpush.bf16.msra.mxu0 %v1909
    %2640 = vmatpush.bf16.msra.mxu0 %v1907
    %2641 = vmatpush.bf16.msra.mxu0 %v1905
    %2642 = vmatpush.bf16.msra.mxu0 %v1903
    %2643 = vmatpush.bf16.msra.mxu0 %v1901
    %2644 = vmatpush.bf16.msra.mxu0 %v1899
    %2645 = vmatpush.bf16.msra.mxu0 %v1897
    %2646 = vmatmul.bf16.gmra.mxu0 %v196
    %v2647 = vpop.f32.mrf.mxu0
    %v2648 = vadd.f32 %v2635, %v2647
    %v2649 = vpop.f32.mrf.mxu0
    %2650 = vdwg.mxu0
    %2651 = vmatpush.bf16.msra.mxu0 %v1927
    %2652 = vmatpush.bf16.msra.mxu0 %v1925
    %2653 = vmatpush.bf16.msra.mxu0 %v1923
    %2654 = vmatpush.bf16.msra.mxu0 %v1921
    %2655 = vmatpush.bf16.msra.mxu0 %v1919
    %2656 = vmatpush.bf16.msra.mxu0 %v1917
    %2657 = vmatpush.bf16.msra.mxu0 %v1915
    %2658 = vmatpush.bf16.msra.mxu0 %v1913
    %2659 = vmatmul.bf16.gmra.mxu0 %v197
    %v2660 = vpop.f32.mrf.mxu0
    %v2661 = vadd.f32 %v2648, %v2660
    %v2662 = vpop.f32.mrf.mxu0
    %2663 = vdwg.mxu0
    %2664 = vmatpush.bf16.msra.mxu0 %v1943
    %2665 = vmatpush.bf16.msra.mxu0 %v1941
    %2666 = vmatpush.bf16.msra.mxu0 %v1939
    %2667 = vmatpush.bf16.msra.mxu0 %v1937
    %2668 = vmatpush.bf16.msra.mxu0 %v1935
    %2669 = vmatpush.bf16.msra.mxu0 %v1933
    %2670 = vmatpush.bf16.msra.mxu0 %v1931
    %2671 = vmatpush.bf16.msra.mxu0 %v1929
    %2672 = vmatmul.bf16.gmra.mxu0 %v198
    %v2673 = vpop.f32.mrf.mxu0
    %v2674 = vadd.f32 %v2661, %v2673
    %v2675 = vpop.f32.mrf.mxu0
    %2676 = vdwg.mxu0
    %2677 = vmatpush.bf16.msra.mxu0 %v1959
    %2678 = vmatpush.bf16.msra.mxu0 %v1957
    %2679 = vmatpush.bf16.msra.mxu0 %v1955
    %2680 = vmatpush.bf16.msra.mxu0 %v1953
    %2681 = vmatpush.bf16.msra.mxu0 %v1951
    %2682 = vmatpush.bf16.msra.mxu0 %v1949
    %2683 = vmatpush.bf16.msra.mxu0 %v1947
    %2684 = vmatpush.bf16.msra.mxu0 %v1945
    %2685 = vmatmul.bf16.gmra.mxu0 %v199
    %v2686 = vpop.f32.mrf.mxu0
    %v2687 = vadd.f32 %v2674, %v2686
    %v2688 = vpop.f32.mrf.mxu0
    %2689 = vdwg.mxu0
    %2690 = vmatpush.bf16.msra.mxu0 %v1975
    %2691 = vmatpush.bf16.msra.mxu0 %v1973
    %2692 = vmatpush.bf16.msra.mxu0 %v1971
    %2693 = vmatpush.bf16.msra.mxu0 %v1969
    %2694 = vmatpush.bf16.msra.mxu0 %v1967
    %2695 = vmatpush.bf16.msra.mxu0 %v1965
    %2696 = vmatpush.bf16.msra.mxu0 %v1963
    %2697 = vmatpush.bf16.msra.mxu0 %v1961
    %2698 = vmatmul.bf16.gmra.mxu0 %v200
    %v2699 = vpop.f32.mrf.mxu0
    %v2700 = vadd.f32 %v2687, %v2699
    %v2701 = vpop.f32.mrf.mxu0
    %2702 = vdwg.mxu0
    %2703 = vmatpush.bf16.msra.mxu0 %v1991
    %2704 = vmatpush.bf16.msra.mxu0 %v1989
    %2705 = vmatpush.bf16.msra.mxu0 %v1987
    %2706 = vmatpush.bf16.msra.mxu0 %v1985
    %2707 = vmatpush.bf16.msra.mxu0 %v1983
    %2708 = vmatpush.bf16.msra.mxu0 %v1981
    %2709 = vmatpush.bf16.msra.mxu0 %v1979
    %2710 = vmatpush.bf16.msra.mxu0 %v1977
    %2711 = vmatmul.bf16.gmra.mxu0 %v201
    %v2712 = vpop.f32.mrf.mxu0
    %v2713 = vadd.f32 %v2700, %v2712
    %v2714 = vpop.f32.mrf.mxu0
    %2715 = vdwg.mxu0
    %2716 = vmatpush.bf16.msra.mxu0 %v2007
    %2717 = vmatpush.bf16.msra.mxu0 %v2005
    %2718 = vmatpush.bf16.msra.mxu0 %v2003
    %2719 = vmatpush.bf16.msra.mxu0 %v2001
    %2720 = vmatpush.bf16.msra.mxu0 %v1999
    %2721 = vmatpush.bf16.msra.mxu0 %v1997
    %2722 = vmatpush.bf16.msra.mxu0 %v1995
    %2723 = vmatpush.bf16.msra.mxu0 %v1993
    %2724 = vmatmul.bf16.gmra.mxu0 %v202
    %v2725 = vpop.f32.mrf.mxu0
    %v2726 = vadd.f32 %v2713, %v2725
    %v2727 = vpop.f32.mrf.mxu0
    %2728 = vdwg.mxu0
    %2729 = vmatpush.bf16.msra.mxu0 %v2023
    %2730 = vmatpush.bf16.msra.mxu0 %v2021
    %2731 = vmatpush.bf16.msra.mxu0 %v2019
    %2732 = vmatpush.bf16.msra.mxu0 %v2017
    %2733 = vmatpush.bf16.msra.mxu0 %v2015
    %2734 = vmatpush.bf16.msra.mxu0 %v2013
    %2735 = vmatpush.bf16.msra.mxu0 %v2011
    %2736 = vmatpush.bf16.msra.mxu0 %v2009
    %2737 = vmatmul.bf16.gmra.mxu0 %v203
    %v2738 = vpop.f32.mrf.mxu0
    %v2739 = vadd.f32 %v2726, %v2738
    %v2740 = vpop.f32.mrf.mxu0
    %2741 = vdwg.mxu0
    %2742 = vmatpush.bf16.msra.mxu0 %v2039
    %2743 = vmatpush.bf16.msra.mxu0 %v2037
    %2744 = vmatpush.bf16.msra.mxu0 %v2035
    %2745 = vmatpush.bf16.msra.mxu0 %v2033
    %2746 = vmatpush.bf16.msra.mxu0 %v2031
    %2747 = vmatpush.bf16.msra.mxu0 %v2029
    %2748 = vmatpush.bf16.msra.mxu0 %v2027
    %2749 = vmatpush.bf16.msra.mxu0 %v2025
    %2750 = vmatmul.bf16.gmra.mxu0 %v204
    %v2751 = vpop.f32.mrf.mxu0
    %v2752 = vadd.f32 %v2739, %v2751
    %v2753 = vpop.f32.mrf.mxu0
    %2754 = vdwg.mxu0
    %2755 = vmatpush.bf16.msra.mxu0 %v2055
    %2756 = vmatpush.bf16.msra.mxu0 %v2053
    %2757 = vmatpush.bf16.msra.mxu0 %v2051
    %2758 = vmatpush.bf16.msra.mxu0 %v2049
    %2759 = vmatpush.bf16.msra.mxu0 %v2047
    %2760 = vmatpush.bf16.msra.mxu0 %v2045
    %2761 = vmatpush.bf16.msra.mxu0 %v2043
    %2762 = vmatpush.bf16.msra.mxu0 %v2041
    %2763 = vmatmul.bf16.gmra.mxu0 %v205
    %v2764 = vpop.f32.mrf.mxu0
    %v2765 = vadd.f32 %v2752, %v2764
    %v2766 = vpop.f32.mrf.mxu0
    %2767 = vdwg.mxu0
    %2768 = vmatpush.bf16.msra.mxu0 %v2071
    %2769 = vmatpush.bf16.msra.mxu0 %v2069
    %2770 = vmatpush.bf16.msra.mxu0 %v2067
    %2771 = vmatpush.bf16.msra.mxu0 %v2065
    %2772 = vmatpush.bf16.msra.mxu0 %v2063
    %2773 = vmatpush.bf16.msra.mxu0 %v2061
    %2774 = vmatpush.bf16.msra.mxu0 %v2059
    %2775 = vmatpush.bf16.msra.mxu0 %v2057
    %2776 = vmatmul.bf16.gmra.mxu0 %v206
    %v2777 = vpop.f32.mrf.mxu0
    %v2778 = vadd.f32 %v2765, %v2777
    %v2779 = vpop.f32.mrf.mxu0
    %2780 = vdwg.mxu0
    %2781 = vmatpush.bf16.msra.mxu0 %v2087
    %2782 = vmatpush.bf16.msra.mxu0 %v2085
    %2783 = vmatpush.bf16.msra.mxu0 %v2083
    %2784 = vmatpush.bf16.msra.mxu0 %v2081
    %2785 = vmatpush.bf16.msra.mxu0 %v2079
    %2786 = vmatpush.bf16.msra.mxu0 %v2077
    %2787 = vmatpush.bf16.msra.mxu0 %v2075
    %2788 = vmatpush.bf16.msra.mxu0 %v2073
    %2789 = vmatmul.bf16.gmra.mxu0 %v207
    %v2790 = vpop.f32.mrf.mxu0
    %v2791 = vadd.f32 %v2778, %v2790
    %v2792 = vpop.f32.mrf.mxu0
    %2793 = vdwg.mxu0
    %2794 = vmatpush.bf16.msra.mxu0 %v2103
    %2795 = vmatpush.bf16.msra.mxu0 %v2101
    %2796 = vmatpush.bf16.msra.mxu0 %v2099
    %2797 = vmatpush.bf16.msra.mxu0 %v2097
    %2798 = vmatpush.bf16.msra.mxu0 %v2095
    %2799 = vmatpush.bf16.msra.mxu0 %v2093
    %2800 = vmatpush.bf16.msra.mxu0 %v2091
    %2801 = vmatpush.bf16.msra.mxu0 %v2089
    %2802 = vmatmul.bf16.gmra.mxu0 %v208
    %v2803 = vpop.f32.mrf.mxu0
    %v2804 = vadd.f32 %v2791, %v2803
    %v2805 = vpop.f32.mrf.mxu0
    %2806 = vdwg.mxu0
    %2807 = vmatpush.bf16.msra.mxu0 %v2119
    %2808 = vmatpush.bf16.msra.mxu0 %v2117
    %2809 = vmatpush.bf16.msra.mxu0 %v2115
    %2810 = vmatpush.bf16.msra.mxu0 %v2113
    %2811 = vmatpush.bf16.msra.mxu0 %v2111
    %2812 = vmatpush.bf16.msra.mxu0 %v2109
    %2813 = vmatpush.bf16.msra.mxu0 %v2107
    %2814 = vmatpush.bf16.msra.mxu0 %v2105
    %2815 = vmatmul.bf16.gmra.mxu0 %v209
    %v2816 = vpop.f32.mrf.mxu0
    %v2817 = vadd.f32 %v2804, %v2816
    %v2818 = vpop.f32.mrf.mxu0
    %2819 = vdwg.mxu0
    %2820 = vmatpush.bf16.msra.mxu0 %v2135
    %2821 = vmatpush.bf16.msra.mxu0 %v2133
    %2822 = vmatpush.bf16.msra.mxu0 %v2131
    %2823 = vmatpush.bf16.msra.mxu0 %v2129
    %2824 = vmatpush.bf16.msra.mxu0 %v2127
    %2825 = vmatpush.bf16.msra.mxu0 %v2125
    %2826 = vmatpush.bf16.msra.mxu0 %v2123
    %2827 = vmatpush.bf16.msra.mxu0 %v2121
    %2828 = vmatmul.bf16.gmra.mxu0 %v210
    %v2829 = vpop.f32.mrf.mxu0
    %v2830 = vadd.f32 %v2817, %v2829
    %v2831 = vpop.f32.mrf.mxu0
    %2832 = vdwg.mxu0
    %2833 = vmatpush.bf16.msra.mxu0 %v1768
    %2834 = vmatpush.bf16.msra.mxu0 %v1766
    %2835 = vmatpush.bf16.msra.mxu0 %v1764
    %2836 = vmatpush.bf16.msra.mxu0 %v1762
    %2837 = vmatpush.bf16.msra.mxu0 %v1760
    %2838 = vmatpush.bf16.msra.mxu0 %v1758
    %2839 = vmatpush.bf16.msra.mxu0 %v1756
    %2840 = vmatpush.bf16.msra.mxu0 %v1754
    %2841 = vmatmul.bf16.gmra.mxu0 %v187
    %v2842 = vpop.f32.mrf.mxu0
    %v2843 = vadd.f32 %v598, %v2842
    %v2844 = vpop.f32.mrf.mxu0
    %2845 = vdwg.mxu0
    %2846 = vmatpush.bf16.msra.mxu0 %v1784
    %2847 = vmatpush.bf16.msra.mxu0 %v1782
    %2848 = vmatpush.bf16.msra.mxu0 %v1780
    %2849 = vmatpush.bf16.msra.mxu0 %v1778
    %2850 = vmatpush.bf16.msra.mxu0 %v1776
    %2851 = vmatpush.bf16.msra.mxu0 %v1774
    %2852 = vmatpush.bf16.msra.mxu0 %v1772
    %2853 = vmatpush.bf16.msra.mxu0 %v1770
    %2854 = vmatmul.bf16.gmra.mxu0 %v188
    %v2855 = vpop.f32.mrf.mxu0
    %v2856 = vadd.f32 %v2843, %v2855
    %v2857 = vpop.f32.mrf.mxu0
    %2858 = vdwg.mxu0
    %2859 = vmatpush.bf16.msra.mxu0 %v1800
    %2860 = vmatpush.bf16.msra.mxu0 %v1798
    %2861 = vmatpush.bf16.msra.mxu0 %v1796
    %2862 = vmatpush.bf16.msra.mxu0 %v1794
    %2863 = vmatpush.bf16.msra.mxu0 %v1792
    %2864 = vmatpush.bf16.msra.mxu0 %v1790
    %2865 = vmatpush.bf16.msra.mxu0 %v1788
    %2866 = vmatpush.bf16.msra.mxu0 %v1786
    %2867 = vmatmul.bf16.gmra.mxu0 %v189
    %v2868 = vpop.f32.mrf.mxu0
    %v2869 = vadd.f32 %v2856, %v2868
    %v2870 = vpop.f32.mrf.mxu0
    %2871 = vdwg.mxu0
    %2872 = vmatpush.bf16.msra.mxu0 %v1816
    %2873 = vmatpush.bf16.msra.mxu0 %v1814
    %2874 = vmatpush.bf16.msra.mxu0 %v1812
    %2875 = vmatpush.bf16.msra.mxu0 %v1810
    %2876 = vmatpush.bf16.msra.mxu0 %v1808
    %2877 = vmatpush.bf16.msra.mxu0 %v1806
    %2878 = vmatpush.bf16.msra.mxu0 %v1804
    %2879 = vmatpush.bf16.msra.mxu0 %v1802
    %2880 = vmatmul.bf16.gmra.mxu0 %v190
    %v2881 = vpop.f32.mrf.mxu0
    %v2882 = vadd.f32 %v2869, %v2881
    %v2883 = vpop.f32.mrf.mxu0
    %2884 = vdwg.mxu0
    %2885 = vmatpush.bf16.msra.mxu0 %v1832
    %2886 = vmatpush.bf16.msra.mxu0 %v1830
    %2887 = vmatpush.bf16.msra.mxu0 %v1828
    %2888 = vmatpush.bf16.msra.mxu0 %v1826
    %2889 = vmatpush.bf16.msra.mxu0 %v1824
    %2890 = vmatpush.bf16.msra.mxu0 %v1822
    %2891 = vmatpush.bf16.msra.mxu0 %v1820
    %2892 = vmatpush.bf16.msra.mxu0 %v1818
    %2893 = vmatmul.bf16.gmra.mxu0 %v191
    %v2894 = vpop.f32.mrf.mxu0
    %v2895 = vadd.f32 %v2882, %v2894
    %v2896 = vpop.f32.mrf.mxu0
    %2897 = vdwg.mxu0
    %2898 = vmatpush.bf16.msra.mxu0 %v1848
    %2899 = vmatpush.bf16.msra.mxu0 %v1846
    %2900 = vmatpush.bf16.msra.mxu0 %v1844
    %2901 = vmatpush.bf16.msra.mxu0 %v1842
    %2902 = vmatpush.bf16.msra.mxu0 %v1840
    %2903 = vmatpush.bf16.msra.mxu0 %v1838
    %2904 = vmatpush.bf16.msra.mxu0 %v1836
    %2905 = vmatpush.bf16.msra.mxu0 %v1834
    %2906 = vmatmul.bf16.gmra.mxu0 %v192
    %v2907 = vpop.f32.mrf.mxu0
    %v2908 = vadd.f32 %v2895, %v2907
    %v2909 = vpop.f32.mrf.mxu0
    %2910 = vdwg.mxu0
    %2911 = vmatpush.bf16.msra.mxu0 %v1864
    %2912 = vmatpush.bf16.msra.mxu0 %v1862
    %2913 = vmatpush.bf16.msra.mxu0 %v1860
    %2914 = vmatpush.bf16.msra.mxu0 %v1858
    %2915 = vmatpush.bf16.msra.mxu0 %v1856
    %2916 = vmatpush.bf16.msra.mxu0 %v1854
    %2917 = vmatpush.bf16.msra.mxu0 %v1852
    %2918 = vmatpush.bf16.msra.mxu0 %v1850
    %2919 = vmatmul.bf16.gmra.mxu0 %v193
    %v2920 = vpop.f32.mrf.mxu0
    %v2921 = vadd.f32 %v2908, %v2920
    %v2922 = vpop.f32.mrf.mxu0
    %2923 = vdwg.mxu0
    %2924 = vmatpush.bf16.msra.mxu0 %v1880
    %2925 = vmatpush.bf16.msra.mxu0 %v1878
    %2926 = vmatpush.bf16.msra.mxu0 %v1876
    %2927 = vmatpush.bf16.msra.mxu0 %v1874
    %2928 = vmatpush.bf16.msra.mxu0 %v1872
    %2929 = vmatpush.bf16.msra.mxu0 %v1870
    %2930 = vmatpush.bf16.msra.mxu0 %v1868
    %2931 = vmatpush.bf16.msra.mxu0 %v1866
    %2932 = vmatmul.bf16.gmra.mxu0 %v194
    %v2933 = vpop.f32.mrf.mxu0
    %v2934 = vadd.f32 %v2921, %v2933
    %v2935 = vpop.f32.mrf.mxu0
    %2936 = vdwg.mxu0
    %2937 = vmatpush.bf16.msra.mxu0 %v1896
    %2938 = vmatpush.bf16.msra.mxu0 %v1894
    %2939 = vmatpush.bf16.msra.mxu0 %v1892
    %2940 = vmatpush.bf16.msra.mxu0 %v1890
    %2941 = vmatpush.bf16.msra.mxu0 %v1888
    %2942 = vmatpush.bf16.msra.mxu0 %v1886
    %2943 = vmatpush.bf16.msra.mxu0 %v1884
    %2944 = vmatpush.bf16.msra.mxu0 %v1882
    %2945 = vmatmul.bf16.gmra.mxu0 %v195
    %v2946 = vpop.f32.mrf.mxu0
    %v2947 = vadd.f32 %v2934, %v2946
    %v2948 = vpop.f32.mrf.mxu0
    %2949 = vdwg.mxu0
    %2950 = vmatpush.bf16.msra.mxu0 %v1912
    %2951 = vmatpush.bf16.msra.mxu0 %v1910
    %2952 = vmatpush.bf16.msra.mxu0 %v1908
    %2953 = vmatpush.bf16.msra.mxu0 %v1906
    %2954 = vmatpush.bf16.msra.mxu0 %v1904
    %2955 = vmatpush.bf16.msra.mxu0 %v1902
    %2956 = vmatpush.bf16.msra.mxu0 %v1900
    %2957 = vmatpush.bf16.msra.mxu0 %v1898
    %2958 = vmatmul.bf16.gmra.mxu0 %v196
    %v2959 = vpop.f32.mrf.mxu0
    %v2960 = vadd.f32 %v2947, %v2959
    %v2961 = vpop.f32.mrf.mxu0
    %2962 = vdwg.mxu0
    %2963 = vmatpush.bf16.msra.mxu0 %v1928
    %2964 = vmatpush.bf16.msra.mxu0 %v1926
    %2965 = vmatpush.bf16.msra.mxu0 %v1924
    %2966 = vmatpush.bf16.msra.mxu0 %v1922
    %2967 = vmatpush.bf16.msra.mxu0 %v1920
    %2968 = vmatpush.bf16.msra.mxu0 %v1918
    %2969 = vmatpush.bf16.msra.mxu0 %v1916
    %2970 = vmatpush.bf16.msra.mxu0 %v1914
    %2971 = vmatmul.bf16.gmra.mxu0 %v197
    %v2972 = vpop.f32.mrf.mxu0
    %v2973 = vadd.f32 %v2960, %v2972
    %v2974 = vpop.f32.mrf.mxu0
    %2975 = vdwg.mxu0
    %2976 = vmatpush.bf16.msra.mxu0 %v1944
    %2977 = vmatpush.bf16.msra.mxu0 %v1942
    %2978 = vmatpush.bf16.msra.mxu0 %v1940
    %2979 = vmatpush.bf16.msra.mxu0 %v1938
    %2980 = vmatpush.bf16.msra.mxu0 %v1936
    %2981 = vmatpush.bf16.msra.mxu0 %v1934
    %2982 = vmatpush.bf16.msra.mxu0 %v1932
    %2983 = vmatpush.bf16.msra.mxu0 %v1930
    %2984 = vmatmul.bf16.gmra.mxu0 %v198
    %v2985 = vpop.f32.mrf.mxu0
    %v2986 = vadd.f32 %v2973, %v2985
    %v2987 = vpop.f32.mrf.mxu0
    %2988 = vdwg.mxu0
    %2989 = vmatpush.bf16.msra.mxu0 %v1960
    %2990 = vmatpush.bf16.msra.mxu0 %v1958
    %2991 = vmatpush.bf16.msra.mxu0 %v1956
    %2992 = vmatpush.bf16.msra.mxu0 %v1954
    %2993 = vmatpush.bf16.msra.mxu0 %v1952
    %2994 = vmatpush.bf16.msra.mxu0 %v1950
    %2995 = vmatpush.bf16.msra.mxu0 %v1948
    %2996 = vmatpush.bf16.msra.mxu0 %v1946
    %2997 = vmatmul.bf16.gmra.mxu0 %v199
    %v2998 = vpop.f32.mrf.mxu0
    %v2999 = vadd.f32 %v2986, %v2998
    %v3000 = vpop.f32.mrf.mxu0
    %3001 = vdwg.mxu0
    %3002 = vmatpush.bf16.msra.mxu0 %v1976
    %3003 = vmatpush.bf16.msra.mxu0 %v1974
    %3004 = vmatpush.bf16.msra.mxu0 %v1972
    %3005 = vmatpush.bf16.msra.mxu0 %v1970
    %3006 = vmatpush.bf16.msra.mxu0 %v1968
    %3007 = vmatpush.bf16.msra.mxu0 %v1966
    %3008 = vmatpush.bf16.msra.mxu0 %v1964
    %3009 = vmatpush.bf16.msra.mxu0 %v1962
    %3010 = vmatmul.bf16.gmra.mxu0 %v200
    %v3011 = vpop.f32.mrf.mxu0
    %v3012 = vadd.f32 %v2999, %v3011
    %v3013 = vpop.f32.mrf.mxu0
    %3014 = vdwg.mxu0
    %3015 = vmatpush.bf16.msra.mxu0 %v1992
    %3016 = vmatpush.bf16.msra.mxu0 %v1990
    %3017 = vmatpush.bf16.msra.mxu0 %v1988
    %3018 = vmatpush.bf16.msra.mxu0 %v1986
    %3019 = vmatpush.bf16.msra.mxu0 %v1984
    %3020 = vmatpush.bf16.msra.mxu0 %v1982
    %3021 = vmatpush.bf16.msra.mxu0 %v1980
    %3022 = vmatpush.bf16.msra.mxu0 %v1978
    %3023 = vmatmul.bf16.gmra.mxu0 %v201
    %v3024 = vpop.f32.mrf.mxu0
    %v3025 = vadd.f32 %v3012, %v3024
    %v3026 = vpop.f32.mrf.mxu0
    %3027 = vdwg.mxu0
    %3028 = vmatpush.bf16.msra.mxu0 %v2008
    %3029 = vmatpush.bf16.msra.mxu0 %v2006
    %3030 = vmatpush.bf16.msra.mxu0 %v2004
    %3031 = vmatpush.bf16.msra.mxu0 %v2002
    %3032 = vmatpush.bf16.msra.mxu0 %v2000
    %3033 = vmatpush.bf16.msra.mxu0 %v1998
    %3034 = vmatpush.bf16.msra.mxu0 %v1996
    %3035 = vmatpush.bf16.msra.mxu0 %v1994
    %3036 = vmatmul.bf16.gmra.mxu0 %v202
    %v3037 = vpop.f32.mrf.mxu0
    %v3038 = vadd.f32 %v3025, %v3037
    %v3039 = vpop.f32.mrf.mxu0
    %3040 = vdwg.mxu0
    %3041 = vmatpush.bf16.msra.mxu0 %v2024
    %3042 = vmatpush.bf16.msra.mxu0 %v2022
    %3043 = vmatpush.bf16.msra.mxu0 %v2020
    %3044 = vmatpush.bf16.msra.mxu0 %v2018
    %3045 = vmatpush.bf16.msra.mxu0 %v2016
    %3046 = vmatpush.bf16.msra.mxu0 %v2014
    %3047 = vmatpush.bf16.msra.mxu0 %v2012
    %3048 = vmatpush.bf16.msra.mxu0 %v2010
    %3049 = vmatmul.bf16.gmra.mxu0 %v203
    %v3050 = vpop.f32.mrf.mxu0
    %v3051 = vadd.f32 %v3038, %v3050
    %v3052 = vpop.f32.mrf.mxu0
    %3053 = vdwg.mxu0
    %3054 = vmatpush.bf16.msra.mxu0 %v2040
    %3055 = vmatpush.bf16.msra.mxu0 %v2038
    %3056 = vmatpush.bf16.msra.mxu0 %v2036
    %3057 = vmatpush.bf16.msra.mxu0 %v2034
    %3058 = vmatpush.bf16.msra.mxu0 %v2032
    %3059 = vmatpush.bf16.msra.mxu0 %v2030
    %3060 = vmatpush.bf16.msra.mxu0 %v2028
    %3061 = vmatpush.bf16.msra.mxu0 %v2026
    %3062 = vmatmul.bf16.gmra.mxu0 %v204
    %v3063 = vpop.f32.mrf.mxu0
    %v3064 = vadd.f32 %v3051, %v3063
    %v3065 = vpop.f32.mrf.mxu0
    %3066 = vdwg.mxu0
    %3067 = vmatpush.bf16.msra.mxu0 %v2056
    %3068 = vmatpush.bf16.msra.mxu0 %v2054
    %3069 = vmatpush.bf16.msra.mxu0 %v2052
    %3070 = vmatpush.bf16.msra.mxu0 %v2050
    %3071 = vmatpush.bf16.msra.mxu0 %v2048
    %3072 = vmatpush.bf16.msra.mxu0 %v2046
    %3073 = vmatpush.bf16.msra.mxu0 %v2044
    %3074 = vmatpush.bf16.msra.mxu0 %v2042
    %3075 = vmatmul.bf16.gmra.mxu0 %v205
    %v3076 = vpop.f32.mrf.mxu0
    %v3077 = vadd.f32 %v3064, %v3076
    %v3078 = vpop.f32.mrf.mxu0
    %3079 = vdwg.mxu0
    %3080 = vmatpush.bf16.msra.mxu0 %v2072
    %3081 = vmatpush.bf16.msra.mxu0 %v2070
    %3082 = vmatpush.bf16.msra.mxu0 %v2068
    %3083 = vmatpush.bf16.msra.mxu0 %v2066
    %3084 = vmatpush.bf16.msra.mxu0 %v2064
    %3085 = vmatpush.bf16.msra.mxu0 %v2062
    %3086 = vmatpush.bf16.msra.mxu0 %v2060
    %3087 = vmatpush.bf16.msra.mxu0 %v2058
    %3088 = vmatmul.bf16.gmra.mxu0 %v206
    %v3089 = vpop.f32.mrf.mxu0
    %v3090 = vadd.f32 %v3077, %v3089
    %v3091 = vpop.f32.mrf.mxu0
    %3092 = vdwg.mxu0
    %3093 = vmatpush.bf16.msra.mxu0 %v2088
    %3094 = vmatpush.bf16.msra.mxu0 %v2086
    %3095 = vmatpush.bf16.msra.mxu0 %v2084
    %3096 = vmatpush.bf16.msra.mxu0 %v2082
    %3097 = vmatpush.bf16.msra.mxu0 %v2080
    %3098 = vmatpush.bf16.msra.mxu0 %v2078
    %3099 = vmatpush.bf16.msra.mxu0 %v2076
    %3100 = vmatpush.bf16.msra.mxu0 %v2074
    %3101 = vmatmul.bf16.gmra.mxu0 %v207
    %v3102 = vpop.f32.mrf.mxu0
    %v3103 = vadd.f32 %v3090, %v3102
    %v3104 = vpop.f32.mrf.mxu0
    %3105 = vdwg.mxu0
    %3106 = vmatpush.bf16.msra.mxu0 %v2104
    %3107 = vmatpush.bf16.msra.mxu0 %v2102
    %3108 = vmatpush.bf16.msra.mxu0 %v2100
    %3109 = vmatpush.bf16.msra.mxu0 %v2098
    %3110 = vmatpush.bf16.msra.mxu0 %v2096
    %3111 = vmatpush.bf16.msra.mxu0 %v2094
    %3112 = vmatpush.bf16.msra.mxu0 %v2092
    %3113 = vmatpush.bf16.msra.mxu0 %v2090
    %3114 = vmatmul.bf16.gmra.mxu0 %v208
    %v3115 = vpop.f32.mrf.mxu0
    %v3116 = vadd.f32 %v3103, %v3115
    %v3117 = vpop.f32.mrf.mxu0
    %3118 = vdwg.mxu0
    %3119 = vmatpush.bf16.msra.mxu0 %v2120
    %3120 = vmatpush.bf16.msra.mxu0 %v2118
    %3121 = vmatpush.bf16.msra.mxu0 %v2116
    %3122 = vmatpush.bf16.msra.mxu0 %v2114
    %3123 = vmatpush.bf16.msra.mxu0 %v2112
    %3124 = vmatpush.bf16.msra.mxu0 %v2110
    %3125 = vmatpush.bf16.msra.mxu0 %v2108
    %3126 = vmatpush.bf16.msra.mxu0 %v2106
    %3127 = vmatmul.bf16.gmra.mxu0 %v209
    %v3128 = vpop.f32.mrf.mxu0
    %v3129 = vadd.f32 %v3116, %v3128
    %v3130 = vpop.f32.mrf.mxu0
    %3131 = vdwg.mxu0
    %3132 = vmatpush.bf16.msra.mxu0 %v2136
    %3133 = vmatpush.bf16.msra.mxu0 %v2134
    %3134 = vmatpush.bf16.msra.mxu0 %v2132
    %3135 = vmatpush.bf16.msra.mxu0 %v2130
    %3136 = vmatpush.bf16.msra.mxu0 %v2128
    %3137 = vmatpush.bf16.msra.mxu0 %v2126
    %3138 = vmatpush.bf16.msra.mxu0 %v2124
    %3139 = vmatpush.bf16.msra.mxu0 %v2122
    %3140 = vmatmul.bf16.gmra.mxu0 %v210
    %v3141 = vpop.f32.mrf.mxu0
    %v3142 = vadd.f32 %v3129, %v3141
    %v3143 = vpop.f32.mrf.mxu0
    %3144 = vdwg.mxu0
    %v3145 = vmax.f32 %v2830, 0.0
    %v3146 = vmax.f32 %v3142, 0.0
    %v3147 = vpack.c.bf16 %v3145, %v3145
    %v3148 = vpack.c.bf16 %v3146, %v3146
    %v3149 = vld [vmem:[#allocation7] sm:$0xf]
    %v3150 = vld [vmem:[#allocation7 + $0x4] sm:$0xf]
    %v3151 = vld [vmem:[#allocation7 + $0x8] sm:$0xf]
    %v3152 = vld [vmem:[#allocation7 + $0xc] sm:$0xf]
    %v3153 = vld [vmem:[#allocation7 + $0x10] sm:$0xf]
    %v3154 = vld [vmem:[#allocation7 + $0x14] sm:$0xf]
    %v3155 = vld [vmem:[#allocation7 + $0x18] sm:$0xf]
    %v3156 = vld [vmem:[#allocation7 + $0x1c] sm:$0xf]
    %v3157 = vld [vmem:[#allocation7 + $0x20] sm:$0xf]
    %v3158 = vld [vmem:[#allocation7 + $0x24] sm:$0xf]
    %v3159 = vld [vmem:[#allocation7 + $0x28] sm:$0xf]
    %v3160 = vld [vmem:[#allocation7 + $0x2c] sm:$0xf]
    %v3161 = vld [vmem:[#allocation7 + $0x30] sm:$0xf]
    %v3162 = vld [vmem:[#allocation7 + $0x34] sm:$0xf]
    %v3163 = vld [vmem:[#allocation7 + $0x38] sm:$0xf]
    %v3164 = vld [vmem:[#allocation7 + $0x3c] sm:$0xf]
    %v3165 = vld [vmem:[#allocation7 + $0x40] sm:$0xf]
    %v3166 = vld [vmem:[#allocation7 + $0x44] sm:$0xf]
    %v3167 = vld [vmem:[#allocation7 + $0x48] sm:$0xf]
    %v3168 = vld [vmem:[#allocation7 + $0x4c] sm:$0xf]
    %v3169 = vld [vmem:[#allocation7 + $0x50] sm:$0xf]
    %v3170 = vld [vmem:[#allocation7 + $0x54] sm:$0xf]
    %v3171 = vld [vmem:[#allocation7 + $0x58] sm:$0xf]
    %v3172 = vld [vmem:[#allocation7 + $0x5c] sm:$0xf]
    %v3173 = vld [vmem:[#allocation7 + $0x60] sm:$0xf]
    %v3174 = vld [vmem:[#allocation7 + $0x64] sm:$0xf]
    %v3175 = vld [vmem:[#allocation7 + $0x68] sm:$0xf]
    %v3176 = vld [vmem:[#allocation7 + $0x6c] sm:$0xf]
    %v3177 = vld [vmem:[#allocation7 + $0x70] sm:$0xf]
    %v3178 = vld [vmem:[#allocation7 + $0x74] sm:$0xf]
    %v3179 = vld [vmem:[#allocation7 + $0x78] sm:$0xf]
    %v3180 = vld [vmem:[#allocation7 + $0x7c] sm:$0xf]
    %v3181 = vld [vmem:[#allocation8] sm:$0x1]
    %v3183 = vperm.slane %v3181, 0
    %v3217 = vunpack.c.l.b16 %v3149
    %v3218 = vunpack.c.l.b16 %v3150
    %v3219 = vunpack.c.l.b16 %v3151
    %v3220 = vunpack.c.l.b16 %v3152
    %v3221 = vunpack.c.l.b16 %v3153
    %v3222 = vunpack.c.l.b16 %v3154
    %v3223 = vunpack.c.l.b16 %v3155
    %v3224 = vunpack.c.l.b16 %v3156
    %v3225 = vunpack.c.l.b16 %v3157
    %v3226 = vunpack.c.l.b16 %v3158
    %v3227 = vunpack.c.l.b16 %v3159
    %v3228 = vunpack.c.l.b16 %v3160
    %v3229 = vunpack.c.l.b16 %v3161
    %v3230 = vunpack.c.l.b16 %v3162
    %v3231 = vunpack.c.l.b16 %v3163
    %v3232 = vunpack.c.l.b16 %v3164
    %v3233 = vunpack.c.l.b16 %v3165
    %v3234 = vunpack.c.l.b16 %v3166
    %v3235 = vunpack.c.l.b16 %v3167
    %v3236 = vunpack.c.l.b16 %v3168
    %v3237 = vunpack.c.l.b16 %v3169
    %v3238 = vunpack.c.l.b16 %v3170
    %v3239 = vunpack.c.l.b16 %v3171
    %v3240 = vunpack.c.l.b16 %v3172
    %v3241 = vunpack.c.l.b16 %v3173
    %v3242 = vunpack.c.l.b16 %v3174
    %v3243 = vunpack.c.l.b16 %v3175
    %v3244 = vunpack.c.l.b16 %v3176
    %v3245 = vunpack.c.l.b16 %v3177
    %v3246 = vunpack.c.l.b16 %v3178
    %v3247 = vunpack.c.l.b16 %v3179
    %v3248 = vunpack.c.l.b16 %v3180
    %v3249 = vpack.c.b16 %v3218, %v3217
    %v3250 = vpack.c.b16 %v3220, %v3219
    %v3251 = vpack.c.b16 %v3222, %v3221
    %v3252 = vpack.c.b16 %v3224, %v3223
    %v3253 = vpack.c.b16 %v3226, %v3225
    %v3254 = vpack.c.b16 %v3228, %v3227
    %v3255 = vpack.c.b16 %v3230, %v3229
    %v3256 = vpack.c.b16 %v3232, %v3231
    %v3257 = vpack.c.b16 %v3234, %v3233
    %v3258 = vpack.c.b16 %v3236, %v3235
    %v3259 = vpack.c.b16 %v3238, %v3237
    %v3260 = vpack.c.b16 %v3240, %v3239
    %v3261 = vpack.c.b16 %v3242, %v3241
    %v3262 = vpack.c.b16 %v3244, %v3243
    %v3263 = vpack.c.b16 %v3246, %v3245
    %v3264 = vpack.c.b16 %v3248, %v3247
    %3281 = vmatpush.bf16.msra.mxu0 %v3256
    %3282 = vmatpush.bf16.msra.mxu0 %v3255
    %3283 = vmatpush.bf16.msra.mxu0 %v3254
    %3284 = vmatpush.bf16.msra.mxu0 %v3253
    %3285 = vmatpush.bf16.msra.mxu0 %v3252
    %3286 = vmatpush.bf16.msra.mxu0 %v3251
    %3287 = vmatpush.bf16.msra.mxu0 %v3250
    %3288 = vmatpush.bf16.msra.mxu0 %v3249
    %3289 = vmatmul.bf16.gmra.mxu0 %v3147
    %v3290 = vpop.f32.mrf.mxu0
    %v3291 = vadd.f32 %v3183, %v3290
    %v3292 = vpop.f32.mrf.mxu0
    %3293 = vdwg.mxu0
    %3294 = vmatpush.bf16.msra.mxu0 %v3264
    %3295 = vmatpush.bf16.msra.mxu0 %v3263
    %3296 = vmatpush.bf16.msra.mxu0 %v3262
    %3297 = vmatpush.bf16.msra.mxu0 %v3261
    %3298 = vmatpush.bf16.msra.mxu0 %v3260
    %3299 = vmatpush.bf16.msra.mxu0 %v3259
    %3300 = vmatpush.bf16.msra.mxu0 %v3258
    %3301 = vmatpush.bf16.msra.mxu0 %v3257
    %3302 = vmatmul.bf16.gmra.mxu0 %v3148
    %v3303 = vpop.f32.mrf.mxu0
    %v3304 = vadd.f32 %v3291, %v3303
    %v3305 = vpop.f32.mrf.mxu0
    %3306 = vdwg.mxu0
    %v3307 = vmax.f32 %v3304, 0.0
    %v3308 = vpack.c.bf16 %v3307, %v3307
    %v3309 = vld [vmem:[%s5] sm:$0xf]
    %v3310 = vld [vmem:[%s5 + $0x4] sm:$0xf]
    %v3311 = vld [vmem:[%s5 + $0x8] sm:$0xf]
    %v3312 = vld [vmem:[%s5 + $0xc] sm:$0xf]
    %v3313 = vld [vmem:[%s5 + $0x10] sm:$0xf]
    %v3314 = vld [vmem:[%s5 + $0x14] sm:$0xf]
    %v3315 = vld [vmem:[%s5 + $0x18] sm:$0xf]
    %v3316 = vld [vmem:[%s5 + $0x1c] sm:$0xf]
    %v3317 = vld [vmem:[%s5 + $0x20] sm:$0xf]
    %v3318 = vld [vmem:[%s5 + $0x24] sm:$0xf]
    %v3319 = vld [vmem:[%s5 + $0x28] sm:$0xf]
    %v3320 = vld [vmem:[%s5 + $0x2c] sm:$0xf]
    %v3321 = vld [vmem:[%s5 + $0x30] sm:$0xf]
    %v3322 = vld [vmem:[%s5 + $0x34] sm:$0xf]
    %v3323 = vld [vmem:[%s5 + $0x38] sm:$0xf]
    %v3324 = vld [vmem:[%s5 + $0x3c] sm:$0xf]
    %v3325 = vld [vmem:[#allocation10] sm:$0x1]
    %v3327 = vperm.slane %v3325, 0
    %v3345 = vunpack.c.l.b16 %v3309
    %v3346 = vunpack.c.l.b16 %v3310
    %v3347 = vunpack.c.l.b16 %v3311
    %v3348 = vunpack.c.l.b16 %v3312
    %v3349 = vunpack.c.l.b16 %v3313
    %v3350 = vunpack.c.l.b16 %v3314
    %v3351 = vunpack.c.l.b16 %v3315
    %v3352 = vunpack.c.l.b16 %v3316
    %v3353 = vunpack.c.l.b16 %v3317
    %v3354 = vunpack.c.l.b16 %v3318
    %v3355 = vunpack.c.l.b16 %v3319
    %v3356 = vunpack.c.l.b16 %v3320
    %v3357 = vunpack.c.l.b16 %v3321
    %v3358 = vunpack.c.l.b16 %v3322
    %v3359 = vunpack.c.l.b16 %v3323
    %v3360 = vunpack.c.l.b16 %v3324
    %v3361 = vpack.c.b16 %v3346, %v3345
    %v3362 = vpack.c.b16 %v3348, %v3347
    %v3363 = vpack.c.b16 %v3350, %v3349
    %v3364 = vpack.c.b16 %v3352, %v3351
    %v3365 = vpack.c.b16 %v3354, %v3353
    %v3366 = vpack.c.b16 %v3356, %v3355
    %v3367 = vpack.c.b16 %v3358, %v3357
    %v3368 = vpack.c.b16 %v3360, %v3359
    %3377 = vmatpush.bf16.msra.mxu0 %v3368
    %3378 = vmatpush.bf16.msra.mxu0 %v3367
    %3379 = vmatpush.bf16.msra.mxu0 %v3366
    %3380 = vmatpush.bf16.msra.mxu0 %v3365
    %3381 = vmatpush.bf16.msra.mxu0 %v3364
    %3382 = vmatpush.bf16.msra.mxu0 %v3363
    %3383 = vmatpush.bf16.msra.mxu0 %v3362
    %3384 = vmatpush.bf16.msra.mxu0 %v3361
    %3385 = vmatmul.bf16.gmra.mxu0 %v3308
    %v3386 = vpop.f32.mrf.mxu0
    %v3387 = vadd.f32 %v3327, %v3386
    %v3388 = vpop.f32.mrf.mxu0
    %3389 = vdwg.mxu0
    %v3390 = vmax.f32 %v3387, 0.0
    %v3391 = vpack.c.bf16 %v3390, %v3390
    %v3392 = vld [vmem:[%s7] sm:$0xf]
    %v3393 = vld [vmem:[%s7 + $0x4] sm:$0xf]
    %v3394 = vld [vmem:[%s7 + $0x8] sm:$0xf]
    %v3395 = vld [vmem:[%s7 + $0xc] sm:$0xf]
    %v3396 = vld [vmem:[%s7 + $0x10] sm:$0xf]
    %v3397 = vld [vmem:[%s7 + $0x14] sm:$0xf]
    %v3398 = vld [vmem:[%s7 + $0x18] sm:$0xf]
    %v3399 = vld [vmem:[%s7 + $0x1c] sm:$0xf]
    %v3400 = vld [vmem:[#allocation11] sm:$0x1]
    %v3402 = vperm.slane %v3400, 0
    %v3412 = vunpack.c.l.b16 %v3392
    %v3413 = vunpack.c.l.b16 %v3393
    %v3414 = vunpack.c.l.b16 %v3394
    %v3415 = vunpack.c.l.b16 %v3395
    %v3416 = vunpack.c.l.b16 %v3396
    %v3417 = vunpack.c.l.b16 %v3397
    %v3418 = vunpack.c.l.b16 %v3398
    %v3419 = vunpack.c.l.b16 %v3399
    %v3420 = vpack.c.b16 %v3413, %v3412
    %v3421 = vpack.c.b16 %v3415, %v3414
    %v3422 = vpack.c.b16 %v3417, %v3416
    %v3423 = vpack.c.b16 %v3419, %v3418
    %vm3428 = vcmask 523264
    %v3430 = vsel %vm3428, %v3391, 0
    %3432 = vmatpush.bf16.msra.mxu0 0
    %3433 = vmatpush.bf16.msra.mxu0 0
    %3434 = vmatpush.bf16.msra.mxu0 0
    %3435 = vmatpush.bf16.msra.mxu0 0
    %3436 = vmatpush.bf16.msra.mxu0 %v3423
    %3437 = vmatpush.bf16.msra.mxu0 %v3422
    %3438 = vmatpush.bf16.msra.mxu0 %v3421
    %3439 = vmatpush.bf16.msra.mxu0 %v3420
    %3440 = vmatmul.bf16.gmra.mxu0 %v3430
    %v3441 = vpop.f32.mrf.mxu0
    %v3442 = vadd.f32 %v3402, %v3441
    %v3443 = vpop.f32.mrf.mxu0
    %3444 = vdwg.mxu0
    %vm3445 = vcmask 74752
    %v3446 = vsel %vm3445, %v3442, -inf
    %3447 = vmax.xlane.f32.xlu0 %v3446
    %v3448 = vpop.xlane.xlu0 %3447
    %v3449 = vsub.f32 %v3442, %v3448
    %v3450 = vmul.f32 %v3449, 1.442695
    %v3451 = vpow.pop %v3450
    %v3452 = vsel %vm3445, %v3451, 0.0
    %3453 = vadd.xlane.f32.xlu0 %v3452
    %v3454 = vpop.xlane.xlu0 %3453
    %v3455 = vlog2.pop %v3454
    %v3456 = vmul.f32 %v3455, 0.6931472
    %v3457 = vsub.f32 %v3449, %v3456
    %3458 = vst.msk [vmem:[#allocation13] sm:$0x3] %vm3445, %v3457
    // Predicated region
    $region62: #{classifier_forward.1} parent=1 // pred_check
      _
    $region63: #{classifier_forward.1} parent=1 // pred_check_branch
      %3460 = sbr.rel (0) target = $region65
    $region64: #{classifier_forward.1} parent=1 // pred_region
      %3462 = vsyncadd [#allocation4], 0
      %s3464 = sshll.u32 [#allocation13], 4
      %s3465 = int_to_ptr.vmem [resolvable:$true] %s3464
      %s3466 = sshll.u32 %s9, 4
      %s3467 = int_to_ptr.hbm [resolvable:$true] %s3466
      %3469 = dma.vmem_to_hbm [thread:$0]  %s3465, 32, %s3467, [#allocation4]
    $region65: #{classifier_forward.1} parent=1 // pred_fallthru
      _
    // Predicated region
    $region66: #{classifier_forward.1} parent=1 // pred_check
      _
    $region67: #{classifier_forward.1} parent=1 // pred_check_branch
      %3471 = sbr.rel (0) target = $region69
    $region68: #{classifier_forward.1} parent=1 // pred_region
      %3473 = dma.done [#allocation4], 32
    $region69: #{classifier_forward.1} parent=1 // pred_fallthru
      _
    %3474 = vsyncpa [#allocation3], 1
    %3475 = vsyncpa [#allocation6], 1
    %3476 = vsyncpa [#allocation9], 1
    %3477 = vsyncpa [#allocation12], 1
    %3478 = vsyncpa [#allocation4], 1

</llo_original>
